<compile_context>
chip_gen: v5e
topology: v5e:2x2
jax: 0.10.0
libtpu: 0.0.40
codegen_flags: <defaults>
</compile_context>

<pallas_src>
import math

import jax
import jax.numpy as jnp
from jax import lax
from jax.experimental import pallas as pl
from jax.experimental.pallas import tpu as pltpu

LN_EPS = 1e-5
_INV_SQRT2 = 1.0 / math.sqrt(2.0)


def _gelu(x, approximate):
    if approximate:
        # tanh approximation: transcendental goes to the EUP slot.
        return jax.nn.gelu(x, approximate=True)
    # PyTorch nn.GELU() default == exact erf form (VPU polynomial).
    return 0.5 * x * (1.0 + lax.erf(x * _INV_SQRT2))


def _layer_norm(x, gamma, beta):
    # One-pass mean / mean-of-squares so both row reductions issue together.
    mu = jnp.mean(x, axis=-1, keepdims=True)
    ms = jnp.mean(x * x, axis=-1, keepdims=True)
    var = jnp.maximum(ms - mu * mu, 0.0)
    return (x - mu) * lax.rsqrt(var + LN_EPS) * gamma + beta


def _make_kernel(approximate_gelu, lhs_bf16):
    mm_dtype = jnp.bfloat16 if lhs_bf16 else jnp.float32

    def kernel(x_ref, w1_ref, w2_ref, p_ref, o_ref):
        # p_ref rows: [b1, b2, g1, be1, g2, be2, g3, be3]
        b1 = p_ref[0:1, :]
        b2 = p_ref[1:2, :]
        g1 = p_ref[2:3, :]
        be1 = p_ref[3:4, :]
        g2 = p_ref[4:5, :]
        be2 = p_ref[5:6, :]
        g3 = p_ref[6:7, :]
        be3 = p_ref[7:8, :]

        x = x_ref[...].astype(jnp.float32)                  # (tile_rows, D)

        # fc1 -> ln1 -> gelu
        h = jnp.dot(x.astype(mm_dtype), w1_ref[...].astype(mm_dtype),
                    preferred_element_type=jnp.float32) + b1
        h = _layer_norm(h, g1, be1)
        h = _gelu(h, approximate_gelu)

        # fc2 -> ln2
        h = jnp.dot(h.astype(mm_dtype), w2_ref[...].astype(mm_dtype),
                    preferred_element_type=jnp.float32) + b2
        h = _layer_norm(h, g2, be2)

        # residual add -> layer_norm -> gelu.  Re-read the residual from VMEM
        # (cheap vld) instead of keeping `x` live across both matmuls.
        h = h + x_ref[...].astype(jnp.float32)
        h = _layer_norm(h, g3, be3)
        h = _gelu(h, approximate_gelu)

        o_ref[...] = h.astype(o_ref.dtype)

    return kernel


def _round_up(n, m):
    return ((n + m - 1) // m) * m


def residual_block(x, params, *, tile_rows=None, approximate_gelu=False,
                   lhs_bf16=False, single_buffer_params=True):
    """x: (seq_len, batch, input_dim) float32."""
    S, B, D = x.shape
    N = S * B
    x_flat = x.reshape(N, D)              # contiguous reshape, no HBM copy

    w1, b1, w2, b2, g1, be1, g2, be2, g3, be3 = params
    # Pack all 8 (1, D) vectors into a single (8, D) grid-constant block.
    pvec = jnp.concatenate([b1, b2, g1, be1, g2, be2, g3, be3], axis=0)

    # Row tile: as large as a small streamed-VMEM budget allows (<= 1024),
    # scaled down with D; multiple of 8 sublanes; clamped so the row count is
    # covered and the "parallel" grid has >= 2 steps (v7x megacore sharding).
    if tile_rows is None:
        tile_rows = max(256, min(1024, (8 << 20) // (16 * D)))
    tile_rows = min(tile_rows, _round_up(N, 8))
    if N > 8:
        tile_rows = min(tile_rows, _round_up(pl.cdiv(N, 2), 8))
    tile_rows = max(8, _round_up(tile_rows, 8))
    grid = (pl.cdiv(N, tile_rows),)       # ragged last block masked by Pallas

    # VMEM budget: streamed x/out row tiles (double-buffered), weight blocks,
    # the packed param block, plus compute temporaries; cap at 48 MiB which is
    # safe below v7x's 64 MiB physical VMEM (v5e/v6e have 128 MiB).
    tile_bytes = tile_rows * D * 4
    wbuf = 1 if single_buffer_params else 2
    footprint = (2 * 2 * tile_bytes                 # x + out, 2 buffers each
                 + wbuf * 2 * D * D * 4             # w1 + w2
                 + wbuf * 8 * max(D, 128) * 4       # packed vectors
                 + 6 * tile_bytes)                  # compute temporaries
    vmem_limit = int(min(max(1.3 * footprint, 32 << 20), 48 << 20))

    kernel = _make_kernel(approximate_gelu, lhs_bf16)
    row_spec = pl.BlockSpec((tile_rows, D), lambda i: (i, 0))

    def build(single_buffer):
        # Constant index_map => the block never changes; single-buffer it to
        # reclaim weight VMEM (decisive for large D, free otherwise).
        extra = dict(pipeline_mode=pl.Buffered(1)) if single_buffer else {}
        full_spec = pl.BlockSpec((D, D), lambda i: (0, 0), **extra)
        vec_spec = pl.BlockSpec((8, D), lambda i: (0, 0), **extra)
        return pl.pallas_call(
            kernel,
            out_shape=jax.ShapeDtypeStruct((N, D), x.dtype),
            grid_spec=pltpu.PrefetchScalarGridSpec(
                num_scalar_prefetch=0,
                grid=grid,
                in_specs=[row_spec,        # x rows
                          full_spec,       # fc1 weight (in, out), pre-T
                          full_spec,       # fc2 weight
                          vec_spec],       # packed biases + LN params
                out_specs=row_spec,
            ),
            compiler_params=pltpu.CompilerParams(
                dimension_semantics=("parallel",),
                vmem_limit_bytes=vmem_limit),
        )

    try:
        out_flat = build(single_buffer_params)(x_flat, w1, w2, pvec)
    except Exception:
        if not single_buffer_params:
            raise
        # Fallback for JAX versions that reject pipeline_mode on BlockSpec.
        out_flat = build(False)(x_flat, w1, w2, pvec)

    return out_flat.reshape(S, B, D)


def init_params(key, input_dim):
    """Parameter init mimicking the module's __init__ shapes.  Linear weights
    are stored already transposed to (in, out) so the kernel does x @ W
    (equivalent to torch's x @ W_torch.T)."""
    D = input_dim
    k1, k2, k3, k4 = jax.random.split(key, 4)
    bound = 1.0 / math.sqrt(D)
    w1 = jax.random.uniform(k1, (D, D), jnp.float32, -bound, bound)   # (in, out)
    b1 = jax.random.uniform(k2, (1, D), jnp.float32, -bound, bound)
    w2 = jax.random.uniform(k3, (D, D), jnp.float32, -bound, bound)
    b2 = jax.random.uniform(k4, (1, D), jnp.float32, -bound, bound)
    # nn.LayerNorm default init: weight=1, bias=0
    g1 = jnp.ones((1, D), jnp.float32);  be1 = jnp.zeros((1, D), jnp.float32)
    g2 = jnp.ones((1, D), jnp.float32);  be2 = jnp.zeros((1, D), jnp.float32)
    g3 = jnp.ones((1, D), jnp.float32);  be3 = jnp.zeros((1, D), jnp.float32)
    return (w1, b1, w2, b2, g1, be1, g2, be2, g3, be3)


def residual_block_ref(x, params, *, approximate_gelu=False):
    """Pure-JAX reference for correctness checking (two-pass LayerNorm)."""
    w1, b1, w2, b2, g1, be1, g2, be2, g3, be3 = params
    S, B, D = x.shape
    xf = x.reshape(-1, D)

    def ln(v, g, b):
        mu = jnp.mean(v, axis=-1, keepdims=True)
        var = jnp.mean((v - mu) ** 2, axis=-1, keepdims=True)
        return (v - mu) / jnp.sqrt(var + LN_EPS) * g + b

    h = _gelu(ln(xf @ w1 + b1, g1, be1), approximate_gelu)
    h = ln(h @ w2 + b2, g2, be2)
    h = h.reshape(S, B, D) + x
    h = ln(h, g3, be3)
    return _gelu(h, approximate_gelu)


if __name__ == "__main__":
    # Small but lane-dense shapes: seq=8, batch=4, hidden=128.
    seq_len, batch, input_dim = 8, 4, 128
    key = jax.random.PRNGKey(0)
    kx, kp = jax.random.split(key)
    x = jax.random.normal(kx, (seq_len, batch, input_dim), jnp.float32)
    params = init_params(kp, input_dim)

    # 1) Fidelity mode: exact-erf GELU == PyTorch nn.GELU() default.
    out_exact = jax.block_until_ready(
        residual_block(x, params, approximate_gelu=False))
    ref_exact = residual_block_ref(x, params, approximate_gelu=False)
    assert out_exact.shape == (seq_len, batch, input_dim)
    assert jnp.allclose(out_exact, ref_exact, atol=2e-4, rtol=2e-4), (
        f"max err {float(jnp.max(jnp.abs(out_exact - ref_exact)))}")

    # 2) Fast mode: tanh GELU (EUP) checked against a matching reference.
    out_fast = jax.block_until_ready(
        residual_block(x, params, approximate_gelu=True))
    ref_fast = residual_block_ref(x, params, approximate_gelu=True)
    assert jnp.allclose(out_fast, ref_fast, atol=2e-4, rtol=2e-4), (
        f"max err {float(jnp.max(jnp.abs(out_fast - ref_fast)))}")

    print("KERNEL_OK")
</pallas_src>

<mosaic_0001>
module attributes {stable_mosaic.version = 11 : i64} {
  func.func @kernel(%arg0: i32, %arg1: memref<16x128xf32, #tpu.memory_space<vmem>>, %arg2: memref<128x128xf32, #tpu.memory_space<vmem>>, %arg3: memref<128x128xf32, #tpu.memory_space<vmem>>, %arg4: memref<8x128xf32, #tpu.memory_space<vmem>>, %arg5: memref<16x128xf32, #tpu.memory_space<vmem>>) attributes {dimension_semantics = [#tpu.dimension_semantics<parallel>], iteration_bounds = array<i64: 2>, scalar_prefetch = 0 : i64, scratch_operands = 0 : i64, tpu.core_type = #tpu.core_type<tc>, window_params = [{transform_indices = @transform_0, window_bounds = array<i64: 16, 128>}, {pipeline_mode = #tpu.pipeline_mode<synchronous>, transform_indices = @transform_1, window_bounds = array<i64: 128, 128>}, {pipeline_mode = #tpu.pipeline_mode<synchronous>, transform_indices = @transform_2, window_bounds = array<i64: 128, 128>}, {pipeline_mode = #tpu.pipeline_mode<synchronous>, transform_indices = @transform_3, window_bounds = array<i64: 8, 128>}, {transform_indices = @transform_4, window_bounds = array<i64: 16, 128>}]} {
    %c0 = arith.constant 0 : index
    %c0_0 = arith.constant 0 : index
    %0 = vector.load %arg4[%c0, %c0_0] : memref<8x128xf32, #tpu.memory_space<vmem>>, vector<1x128xf32>
    %c1 = arith.constant 1 : index
    %c0_1 = arith.constant 0 : index
    %1 = vector.load %arg4[%c1, %c0_1] : memref<8x128xf32, #tpu.memory_space<vmem>>, vector<1x128xf32>
    %c2 = arith.constant 2 : index
    %c0_2 = arith.constant 0 : index
    %2 = vector.load %arg4[%c2, %c0_2] : memref<8x128xf32, #tpu.memory_space<vmem>>, vector<1x128xf32>
    %c3 = arith.constant 3 : index
    %c0_3 = arith.constant 0 : index
    %3 = vector.load %arg4[%c3, %c0_3] : memref<8x128xf32, #tpu.memory_space<vmem>>, vector<1x128xf32>
    %c4 = arith.constant 4 : index
    %c0_4 = arith.constant 0 : index
    %4 = vector.load %arg4[%c4, %c0_4] : memref<8x128xf32, #tpu.memory_space<vmem>>, vector<1x128xf32>
    %c5 = arith.constant 5 : index
    %c0_5 = arith.constant 0 : index
    %5 = vector.load %arg4[%c5, %c0_5] : memref<8x128xf32, #tpu.memory_space<vmem>>, vector<1x128xf32>
    %c6 = arith.constant 6 : index
    %c0_6 = arith.constant 0 : index
    %6 = vector.load %arg4[%c6, %c0_6] : memref<8x128xf32, #tpu.memory_space<vmem>>, vector<1x128xf32>
    %c7 = arith.constant 7 : index
    %c0_7 = arith.constant 0 : index
    %7 = vector.load %arg4[%c7, %c0_7] : memref<8x128xf32, #tpu.memory_space<vmem>>, vector<1x128xf32>
    %c0_8 = arith.constant 0 : index
    %c0_9 = arith.constant 0 : index
    %8 = vector.load %arg1[%c0_8, %c0_9] : memref<16x128xf32, #tpu.memory_space<vmem>>, vector<16x128xf32>
    %c0_10 = arith.constant 0 : index
    %c0_11 = arith.constant 0 : index
    %9 = vector.load %arg2[%c0_10, %c0_11] : memref<128x128xf32, #tpu.memory_space<vmem>>, vector<128x128xf32>
    %cst = arith.constant dense<0.000000e+00> : vector<16x128xf32>
    %10 = tpu.matmul %8, %9, %cst {dimension_numbers = #tpu.dot_dimension_numbers<[1], [0], [0], [1], [0, 0, 1, 1], [], []>} : vector<16x128xf32>, vector<128x128xf32>, vector<16x128xf32> -> vector<16x128xf32>
    %11 = vector.broadcast %0 : vector<1x128xf32> to vector<16x128xf32>
    %12 = arith.addf %10, %11 : vector<16x128xf32>
    %cst_12 = arith.constant dense<0.000000e+00> : vector<16xf32>
    %13 = vector.multi_reduction <add>, %12, %cst_12 [1] : vector<16x128xf32> to vector<16xf32>
    %14 = vector.shape_cast %13 : vector<16xf32> to vector<16x1xf32>
    %cst_13 = arith.constant 1.280000e+02 : f32
    %15 = vector.broadcast %cst_13 : f32 to vector<16x1xf32>
    %16 = arith.divf %14, %15 : vector<16x1xf32>
    %17 = arith.mulf %12, %12 : vector<16x128xf32>
    %cst_14 = arith.constant dense<0.000000e+00> : vector<16xf32>
    %18 = vector.multi_reduction <add>, %17, %cst_14 [1] : vector<16x128xf32> to vector<16xf32>
    %19 = vector.shape_cast %18 : vector<16xf32> to vector<16x1xf32>
    %cst_15 = arith.constant 1.280000e+02 : f32
    %20 = vector.broadcast %cst_15 : f32 to vector<16x1xf32>
    %21 = arith.divf %19, %20 : vector<16x1xf32>
    %22 = arith.mulf %16, %16 : vector<16x1xf32>
    %23 = arith.subf %21, %22 : vector<16x1xf32>
    %cst_16 = arith.constant 0.000000e+00 : f32
    %24 = vector.broadcast %cst_16 : f32 to vector<16x1xf32>
    %25 = arith.maximumf %23, %24 : vector<16x1xf32>
    %26 = vector.broadcast %16 : vector<16x1xf32> to vector<16x128xf32>
    %27 = arith.subf %12, %26 : vector<16x128xf32>
    %cst_17 = arith.constant 9.99999974E-6 : f32
    %28 = vector.broadcast %cst_17 : f32 to vector<16x1xf32>
    %29 = arith.addf %25, %28 : vector<16x1xf32>
    %30 = math.rsqrt %29 : vector<16x1xf32>
    %31 = vector.broadcast %30 : vector<16x1xf32> to vector<16x128xf32>
    %32 = arith.mulf %27, %31 : vector<16x128xf32>
    %33 = vector.broadcast %2 : vector<1x128xf32> to vector<16x128xf32>
    %34 = arith.mulf %32, %33 : vector<16x128xf32>
    %35 = vector.broadcast %3 : vector<1x128xf32> to vector<16x128xf32>
    %36 = arith.addf %34, %35 : vector<16x128xf32>
    %cst_18 = arith.constant 5.000000e-01 : f32
    %37 = vector.broadcast %cst_18 : f32 to vector<16x128xf32>
    %38 = arith.mulf %37, %36 : vector<16x128xf32>
    %cst_19 = arith.constant 0.707106769 : f32
    %39 = vector.broadcast %cst_19 : f32 to vector<16x128xf32>
    %40 = arith.mulf %36, %39 : vector<16x128xf32>
    %41 = math.erf %40 : vector<16x128xf32>
    %cst_20 = arith.constant 1.000000e+00 : f32
    %42 = vector.broadcast %cst_20 : f32 to vector<16x128xf32>
    %43 = arith.addf %42, %41 : vector<16x128xf32>
    %44 = arith.mulf %38, %43 : vector<16x128xf32>
    %c0_21 = arith.constant 0 : index
    %c0_22 = arith.constant 0 : index
    %45 = vector.load %arg3[%c0_21, %c0_22] : memref<128x128xf32, #tpu.memory_space<vmem>>, vector<128x128xf32>
    %cst_23 = arith.constant dense<0.000000e+00> : vector<16x128xf32>
    %46 = tpu.matmul %44, %45, %cst_23 {dimension_numbers = #tpu.dot_dimension_numbers<[1], [0], [0], [1], [0, 0, 1, 1], [], []>} : vector<16x128xf32>, vector<128x128xf32>, vector<16x128xf32> -> vector<16x128xf32>
    %47 = vector.broadcast %1 : vector<1x128xf32> to vector<16x128xf32>
    %48 = arith.addf %46, %47 : vector<16x128xf32>
    %cst_24 = arith.constant dense<0.000000e+00> : vector<16xf32>
    %49 = vector.multi_reduction <add>, %48, %cst_24 [1] : vector<16x128xf32> to vector<16xf32>
    %50 = vector.shape_cast %49 : vector<16xf32> to vector<16x1xf32>
    %cst_25 = arith.constant 1.280000e+02 : f32
    %51 = vector.broadcast %cst_25 : f32 to vector<16x1xf32>
    %52 = arith.divf %50, %51 : vector<16x1xf32>
    %53 = arith.mulf %48, %48 : vector<16x128xf32>
    %cst_26 = arith.constant dense<0.000000e+00> : vector<16xf32>
    %54 = vector.multi_reduction <add>, %53, %cst_26 [1] : vector<16x128xf32> to vector<16xf32>
    %55 = vector.shape_cast %54 : vector<16xf32> to vector<16x1xf32>
    %cst_27 = arith.constant 1.280000e+02 : f32
    %56 = vector.broadcast %cst_27 : f32 to vector<16x1xf32>
    %57 = arith.divf %55, %56 : vector<16x1xf32>
    %58 = arith.mulf %52, %52 : vector<16x1xf32>
    %59 = arith.subf %57, %58 : vector<16x1xf32>
    %cst_28 = arith.constant 0.000000e+00 : f32
    %60 = vector.broadcast %cst_28 : f32 to vector<16x1xf32>
    %61 = arith.maximumf %59, %60 : vector<16x1xf32>
    %62 = vector.broadcast %52 : vector<16x1xf32> to vector<16x128xf32>
    %63 = arith.subf %48, %62 : vector<16x128xf32>
    %cst_29 = arith.constant 9.99999974E-6 : f32
    %64 = vector.broadcast %cst_29 : f32 to vector<16x1xf32>
    %65 = arith.addf %61, %64 : vector<16x1xf32>
    %66 = math.rsqrt %65 : vector<16x1xf32>
    %67 = vector.broadcast %66 : vector<16x1xf32> to vector<16x128xf32>
    %68 = arith.mulf %63, %67 : vector<16x128xf32>
    %69 = vector.broadcast %4 : vector<1x128xf32> to vector<16x128xf32>
    %70 = arith.mulf %68, %69 : vector<16x128xf32>
    %71 = vector.broadcast %5 : vector<1x128xf32> to vector<16x128xf32>
    %72 = arith.addf %70, %71 : vector<16x128xf32>
    %c0_30 = arith.constant 0 : index
    %c0_31 = arith.constant 0 : index
    %73 = vector.load %arg1[%c0_30, %c0_31] : memref<16x128xf32, #tpu.memory_space<vmem>>, vector<16x128xf32>
    %74 = arith.addf %72, %73 : vector<16x128xf32>
    %cst_32 = arith.constant dense<0.000000e+00> : vector<16xf32>
    %75 = vector.multi_reduction <add>, %74, %cst_32 [1] : vector<16x128xf32> to vector<16xf32>
    %76 = vector.shape_cast %75 : vector<16xf32> to vector<16x1xf32>
    %cst_33 = arith.constant 1.280000e+02 : f32
    %77 = vector.broadcast %cst_33 : f32 to vector<16x1xf32>
    %78 = arith.divf %76, %77 : vector<16x1xf32>
    %79 = arith.mulf %74, %74 : vector<16x128xf32>
    %cst_34 = arith.constant dense<0.000000e+00> : vector<16xf32>
    %80 = vector.multi_reduction <add>, %79, %cst_34 [1] : vector<16x128xf32> to vector<16xf32>
    %81 = vector.shape_cast %80 : vector<16xf32> to vector<16x1xf32>
    %cst_35 = arith.constant 1.280000e+02 : f32
    %82 = vector.broadcast %cst_35 : f32 to vector<16x1xf32>
    %83 = arith.divf %81, %82 : vector<16x1xf32>
    %84 = arith.mulf %78, %78 : vector<16x1xf32>
    %85 = arith.subf %83, %84 : vector<16x1xf32>
    %cst_36 = arith.constant 0.000000e+00 : f32
    %86 = vector.broadcast %cst_36 : f32 to vector<16x1xf32>
    %87 = arith.maximumf %85, %86 : vector<16x1xf32>
    %88 = vector.broadcast %78 : vector<16x1xf32> to vector<16x128xf32>
    %89 = arith.subf %74, %88 : vector<16x128xf32>
    %cst_37 = arith.constant 9.99999974E-6 : f32
    %90 = vector.broadcast %cst_37 : f32 to vector<16x1xf32>
    %91 = arith.addf %87, %90 : vector<16x1xf32>
    %92 = math.rsqrt %91 : vector<16x1xf32>
    %93 = vector.broadcast %92 : vector<16x1xf32> to vector<16x128xf32>
    %94 = arith.mulf %89, %93 : vector<16x128xf32>
    %95 = vector.broadcast %6 : vector<1x128xf32> to vector<16x128xf32>
    %96 = arith.mulf %94, %95 : vector<16x128xf32>
    %97 = vector.broadcast %7 : vector<1x128xf32> to vector<16x128xf32>
    %98 = arith.addf %96, %97 : vector<16x128xf32>
    %cst_38 = arith.constant 5.000000e-01 : f32
    %99 = vector.broadcast %cst_38 : f32 to vector<16x128xf32>
    %100 = arith.mulf %99, %98 : vector<16x128xf32>
    %cst_39 = arith.constant 0.707106769 : f32
    %101 = vector.broadcast %cst_39 : f32 to vector<16x128xf32>
    %102 = arith.mulf %98, %101 : vector<16x128xf32>
    %103 = math.erf %102 : vector<16x128xf32>
    %cst_40 = arith.constant 1.000000e+00 : f32
    %104 = vector.broadcast %cst_40 : f32 to vector<16x128xf32>
    %105 = arith.addf %104, %103 : vector<16x128xf32>
    %106 = arith.mulf %100, %105 : vector<16x128xf32>
    %c0_41 = arith.constant 0 : index
    %c0_42 = arith.constant 0 : index
    %107 = vector.load %arg5[%c0_41, %c0_42] : memref<16x128xf32, #tpu.memory_space<vmem>>, vector<16x128xf32>
    tpu.vector_store %arg5[%c0_41, %c0_42], %106 {strides = array<i32>} : memref<16x128xf32, #tpu.memory_space<vmem>>, vector<16x128xf32>,
    return
  }
  func.func @transform_0(%arg0: i32) -> (i32, i32) {
    %c0_i32 = arith.constant 0 : i32
    %c0_i32_0 = arith.constant 0 : i32
    return %arg0, %c0_i32 : i32, i32
  }
  func.func @transform_1(%arg0: i32) -> (i32, i32) {
    %c0_i32 = arith.constant 0 : i32
    %c0_i32_0 = arith.constant 0 : i32
    %c0_i32_1 = arith.constant 0 : i32
    return %c0_i32, %c0_i32_0 : i32, i32
  }
  func.func @transform_2(%arg0: i32) -> (i32, i32) {
    %c0_i32 = arith.constant 0 : i32
    %c0_i32_0 = arith.constant 0 : i32
    %c0_i32_1 = arith.constant 0 : i32
    return %c0_i32, %c0_i32_0 : i32, i32
  }
  func.func @transform_3(%arg0: i32) -> (i32, i32) {
    %c0_i32 = arith.constant 0 : i32
    %c0_i32_0 = arith.constant 0 : i32
    %c0_i32_1 = arith.constant 0 : i32
    return %c0_i32, %c0_i32_0 : i32, i32
  }
  func.func @transform_4(%arg0: i32) -> (i32, i32) {
    %c0_i32 = arith.constant 0 : i32
    %c0_i32_0 = arith.constant 0 : i32
    return %arg0, %c0_i32 : i32, i32
  }
}

module attributes {stable_mosaic.version = 11 : i64} {
  func.func @kernel(%arg0: i32, %arg1: memref<16x128xf32, #tpu.memory_space<vmem>>, %arg2: memref<128x128xf32, #tpu.memory_space<vmem>>, %arg3: memref<128x128xf32, #tpu.memory_space<vmem>>, %arg4: memref<8x128xf32, #tpu.memory_space<vmem>>, %arg5: memref<16x128xf32, #tpu.memory_space<vmem>>) attributes {dimension_semantics = [#tpu.dimension_semantics<parallel>], iteration_bounds = array<i64: 2>, scalar_prefetch = 0 : i64, scratch_operands = 0 : i64, tpu.core_type = #tpu.core_type<tc>, window_params = [{transform_indices = @transform_0, window_bounds = array<i64: 16, 128>}, {pipeline_mode = #tpu.pipeline_mode<synchronous>, transform_indices = @transform_1, window_bounds = array<i64: 128, 128>}, {pipeline_mode = #tpu.pipeline_mode<synchronous>, transform_indices = @transform_2, window_bounds = array<i64: 128, 128>}, {pipeline_mode = #tpu.pipeline_mode<synchronous>, transform_indices = @transform_3, window_bounds = array<i64: 8, 128>}, {transform_indices = @transform_4, window_bounds = array<i64: 16, 128>}]} {
    %c0 = arith.constant 0 : index
    %c0_0 = arith.constant 0 : index
    %0 = vector.load %arg4[%c0, %c0_0] : memref<8x128xf32, #tpu.memory_space<vmem>>, vector<1x128xf32>
    %c1 = arith.constant 1 : index
    %c0_1 = arith.constant 0 : index
    %1 = vector.load %arg4[%c1, %c0_1] : memref<8x128xf32, #tpu.memory_space<vmem>>, vector<1x128xf32>
    %c2 = arith.constant 2 : index
    %c0_2 = arith.constant 0 : index
    %2 = vector.load %arg4[%c2, %c0_2] : memref<8x128xf32, #tpu.memory_space<vmem>>, vector<1x128xf32>
    %c3 = arith.constant 3 : index
    %c0_3 = arith.constant 0 : index
    %3 = vector.load %arg4[%c3, %c0_3] : memref<8x128xf32, #tpu.memory_space<vmem>>, vector<1x128xf32>
    %c4 = arith.constant 4 : index
    %c0_4 = arith.constant 0 : index
    %4 = vector.load %arg4[%c4, %c0_4] : memref<8x128xf32, #tpu.memory_space<vmem>>, vector<1x128xf32>
    %c5 = arith.constant 5 : index
    %c0_5 = arith.constant 0 : index
    %5 = vector.load %arg4[%c5, %c0_5] : memref<8x128xf32, #tpu.memory_space<vmem>>, vector<1x128xf32>
    %c6 = arith.constant 6 : index
    %c0_6 = arith.constant 0 : index
    %6 = vector.load %arg4[%c6, %c0_6] : memref<8x128xf32, #tpu.memory_space<vmem>>, vector<1x128xf32>
    %c7 = arith.constant 7 : index
    %c0_7 = arith.constant 0 : index
    %7 = vector.load %arg4[%c7, %c0_7] : memref<8x128xf32, #tpu.memory_space<vmem>>, vector<1x128xf32>
    %c0_8 = arith.constant 0 : index
    %c0_9 = arith.constant 0 : index
    %8 = vector.load %arg1[%c0_8, %c0_9] : memref<16x128xf32, #tpu.memory_space<vmem>>, vector<16x128xf32>
    %c0_10 = arith.constant 0 : index
    %c0_11 = arith.constant 0 : index
    %9 = vector.load %arg2[%c0_10, %c0_11] : memref<128x128xf32, #tpu.memory_space<vmem>>, vector<128x128xf32>
    %cst = arith.constant dense<0.000000e+00> : vector<16x128xf32>
    %10 = tpu.matmul %8, %9, %cst {dimension_numbers = #tpu.dot_dimension_numbers<[1], [0], [0], [1], [0, 0, 1, 1], [], []>} : vector<16x128xf32>, vector<128x128xf32>, vector<16x128xf32> -> vector<16x128xf32>
    %11 = vector.broadcast %0 : vector<1x128xf32> to vector<16x128xf32>
    %12 = arith.addf %10, %11 : vector<16x128xf32>
    %cst_12 = arith.constant dense<0.000000e+00> : vector<16xf32>
    %13 = vector.multi_reduction <add>, %12, %cst_12 [1] : vector<16x128xf32> to vector<16xf32>
    %14 = vector.shape_cast %13 : vector<16xf32> to vector<16x1xf32>
    %cst_13 = arith.constant 1.280000e+02 : f32
    %15 = vector.broadcast %cst_13 : f32 to vector<16x1xf32>
    %16 = arith.divf %14, %15 : vector<16x1xf32>
    %17 = arith.mulf %12, %12 : vector<16x128xf32>
    %cst_14 = arith.constant dense<0.000000e+00> : vector<16xf32>
    %18 = vector.multi_reduction <add>, %17, %cst_14 [1] : vector<16x128xf32> to vector<16xf32>
    %19 = vector.shape_cast %18 : vector<16xf32> to vector<16x1xf32>
    %cst_15 = arith.constant 1.280000e+02 : f32
    %20 = vector.broadcast %cst_15 : f32 to vector<16x1xf32>
    %21 = arith.divf %19, %20 : vector<16x1xf32>
    %22 = arith.mulf %16, %16 : vector<16x1xf32>
    %23 = arith.subf %21, %22 : vector<16x1xf32>
    %cst_16 = arith.constant 0.000000e+00 : f32
    %24 = vector.broadcast %cst_16 : f32 to vector<16x1xf32>
    %25 = arith.maximumf %23, %24 : vector<16x1xf32>
    %26 = vector.broadcast %16 : vector<16x1xf32> to vector<16x128xf32>
    %27 = arith.subf %12, %26 : vector<16x128xf32>
    %cst_17 = arith.constant 9.99999974E-6 : f32
    %28 = vector.broadcast %cst_17 : f32 to vector<16x1xf32>
    %29 = arith.addf %25, %28 : vector<16x1xf32>
    %30 = math.rsqrt %29 : vector<16x1xf32>
    %31 = vector.broadcast %30 : vector<16x1xf32> to vector<16x128xf32>
    %32 = arith.mulf %27, %31 : vector<16x128xf32>
    %33 = vector.broadcast %2 : vector<1x128xf32> to vector<16x128xf32>
    %34 = arith.mulf %32, %33 : vector<16x128xf32>
    %35 = vector.broadcast %3 : vector<1x128xf32> to vector<16x128xf32>
    %36 = arith.addf %34, %35 : vector<16x128xf32>
    %cst_18 = arith.constant 5.000000e-01 : f32
    %37 = vector.broadcast %cst_18 : f32 to vector<16x128xf32>
    %38 = arith.mulf %37, %36 : vector<16x128xf32>
    %cst_19 = arith.constant 0.707106769 : f32
    %39 = vector.broadcast %cst_19 : f32 to vector<16x128xf32>
    %40 = arith.mulf %36, %39 : vector<16x128xf32>
    %41 = math.erf %40 : vector<16x128xf32>
    %cst_20 = arith.constant 1.000000e+00 : f32
    %42 = vector.broadcast %cst_20 : f32 to vector<16x128xf32>
    %43 = arith.addf %42, %41 : vector<16x128xf32>
    %44 = arith.mulf %38, %43 : vector<16x128xf32>
    %c0_21 = arith.constant 0 : index
    %c0_22 = arith.constant 0 : index
    %45 = vector.load %arg3[%c0_21, %c0_22] : memref<128x128xf32, #tpu.memory_space<vmem>>, vector<128x128xf32>
    %cst_23 = arith.constant dense<0.000000e+00> : vector<16x128xf32>
    %46 = tpu.matmul %44, %45, %cst_23 {dimension_numbers = #tpu.dot_dimension_numbers<[1], [0], [0], [1], [0, 0, 1, 1], [], []>} : vector<16x128xf32>, vector<128x128xf32>, vector<16x128xf32> -> vector<16x128xf32>
    %47 = vector.broadcast %1 : vector<1x128xf32> to vector<16x128xf32>
    %48 = arith.addf %46, %47 : vector<16x128xf32>
    %cst_24 = arith.constant dense<0.000000e+00> : vector<16xf32>
    %49 = vector.multi_reduction <add>, %48, %cst_24 [1] : vector<16x128xf32> to vector<16xf32>
    %50 = vector.shape_cast %49 : vector<16xf32> to vector<16x1xf32>
    %cst_25 = arith.constant 1.280000e+02 : f32
    %51 = vector.broadcast %cst_25 : f32 to vector<16x1xf32>
    %52 = arith.divf %50, %51 : vector<16x1xf32>
    %53 = arith.mulf %48, %48 : vector<16x128xf32>
    %cst_26 = arith.constant dense<0.000000e+00> : vector<16xf32>
    %54 = vector.multi_reduction <add>, %53, %cst_26 [1] : vector<16x128xf32> to vector<16xf32>
    %55 = vector.shape_cast %54 : vector<16xf32> to vector<16x1xf32>
    %cst_27 = arith.constant 1.280000e+02 : f32
    %56 = vector.broadcast %cst_27 : f32 to vector<16x1xf32>
    %57 = arith.divf %55, %56 : vector<16x1xf32>
    %58 = arith.mulf %52, %52 : vector<16x1xf32>
    %59 = arith.subf %57, %58 : vector<16x1xf32>
    %cst_28 = arith.constant 0.000000e+00 : f32
    %60 = vector.broadcast %cst_28 : f32 to vector<16x1xf32>
    %61 = arith.maximumf %59, %60 : vector<16x1xf32>
    %62 = vector.broadcast %52 : vector<16x1xf32> to vector<16x128xf32>
    %63 = arith.subf %48, %62 : vector<16x128xf32>
    %cst_29 = arith.constant 9.99999974E-6 : f32
    %64 = vector.broadcast %cst_29 : f32 to vector<16x1xf32>
    %65 = arith.addf %61, %64 : vector<16x1xf32>
    %66 = math.rsqrt %65 : vector<16x1xf32>
    %67 = vector.broadcast %66 : vector<16x1xf32> to vector<16x128xf32>
    %68 = arith.mulf %63, %67 : vector<16x128xf32>
    %69 = vector.broadcast %4 : vector<1x128xf32> to vector<16x128xf32>
    %70 = arith.mulf %68, %69 : vector<16x128xf32>
    %71 = vector.broadcast %5 : vector<1x128xf32> to vector<16x128xf32>
    %72 = arith.addf %70, %71 : vector<16x128xf32>
    %c0_30 = arith.constant 0 : index
    %c0_31 = arith.constant 0 : index
    %73 = vector.load %arg1[%c0_30, %c0_31] : memref<16x128xf32, #tpu.memory_space<vmem>>, vector<16x128xf32>
    %74 = arith.addf %72, %73 : vector<16x128xf32>
    %cst_32 = arith.constant dense<0.000000e+00> : vector<16xf32>
    %75 = vector.multi_reduction <add>, %74, %cst_32 [1] : vector<16x128xf32> to vector<16xf32>
    %76 = vector.shape_cast %75 : vector<16xf32> to vector<16x1xf32>
    %cst_33 = arith.constant 1.280000e+02 : f32
    %77 = vector.broadcast %cst_33 : f32 to vector<16x1xf32>
    %78 = arith.divf %76, %77 : vector<16x1xf32>
    %79 = arith.mulf %74, %74 : vector<16x128xf32>
    %cst_34 = arith.constant dense<0.000000e+00> : vector<16xf32>
    %80 = vector.multi_reduction <add>, %79, %cst_34 [1] : vector<16x128xf32> to vector<16xf32>
    %81 = vector.shape_cast %80 : vector<16xf32> to vector<16x1xf32>
    %cst_35 = arith.constant 1.280000e+02 : f32
    %82 = vector.broadcast %cst_35 : f32 to vector<16x1xf32>
    %83 = arith.divf %81, %82 : vector<16x1xf32>
    %84 = arith.mulf %78, %78 : vector<16x1xf32>
    %85 = arith.subf %83, %84 : vector<16x1xf32>
    %cst_36 = arith.constant 0.000000e+00 : f32
    %86 = vector.broadcast %cst_36 : f32 to vector<16x1xf32>
    %87 = arith.maximumf %85, %86 : vector<16x1xf32>
    %88 = vector.broadcast %78 : vector<16x1xf32> to vector<16x128xf32>
    %89 = arith.subf %74, %88 : vector<16x128xf32>
    %cst_37 = arith.constant 9.99999974E-6 : f32
    %90 = vector.broadcast %cst_37 : f32 to vector<16x1xf32>
    %91 = arith.addf %87, %90 : vector<16x1xf32>
    %92 = math.rsqrt %91 : vector<16x1xf32>
    %93 = vector.broadcast %92 : vector<16x1xf32> to vector<16x128xf32>
    %94 = arith.mulf %89, %93 : vector<16x128xf32>
    %95 = vector.broadcast %6 : vector<1x128xf32> to vector<16x128xf32>
    %96 = arith.mulf %94, %95 : vector<16x128xf32>
    %97 = vector.broadcast %7 : vector<1x128xf32> to vector<16x128xf32>
    %98 = arith.addf %96, %97 : vector<16x128xf32>
    %cst_38 = arith.constant 5.000000e-01 : f32
    %99 = vector.broadcast %cst_38 : f32 to vector<16x128xf32>
    %100 = arith.mulf %99, %98 : vector<16x128xf32>
    %cst_39 = arith.constant 0.707106769 : f32
    %101 = vector.broadcast %cst_39 : f32 to vector<16x128xf32>
    %102 = arith.mulf %98, %101 : vector<16x128xf32>
    %103 = math.erf %102 : vector<16x128xf32>
    %cst_40 = arith.constant 1.000000e+00 : f32
    %104 = vector.broadcast %cst_40 : f32 to vector<16x128xf32>
    %105 = arith.addf %104, %103 : vector<16x128xf32>
    %106 = arith.mulf %100, %105 : vector<16x128xf32>
    %c0_41 = arith.constant 0 : index
    %c0_42 = arith.constant 0 : index
    %107 = vector.load %arg5[%c0_41, %c0_42] : memref<16x128xf32, #tpu.memory_space<vmem>>, vector<16x128xf32>
    tpu.vector_store %arg5[%c0_41, %c0_42], %106 {strides = array<i32>} : memref<16x128xf32, #tpu.memory_space<vmem>>, vector<16x128xf32>,
    return
  }
  func.func @transform_0(%arg0: i32) -> (i32, i32) {
    %c0_i32 = arith.constant 0 : i32
    %c0_i32_0 = arith.constant 0 : i32
    return %arg0, %c0_i32 : i32, i32
  }
  func.func @transform_1(%arg0: i32) -> (i32, i32) {
    %c0_i32 = arith.constant 0 : i32
    %c0_i32_0 = arith.constant 0 : i32
    %c0_i32_1 = arith.constant 0 : i32
    return %c0_i32, %c0_i32_0 : i32, i32
  }
  func.func @transform_2(%arg0: i32) -> (i32, i32) {
    %c0_i32 = arith.constant 0 : i32
    %c0_i32_0 = arith.constant 0 : i32
    %c0_i32_1 = arith.constant 0 : i32
    return %c0_i32, %c0_i32_0 : i32, i32
  }
  func.func @transform_3(%arg0: i32) -> (i32, i32) {
    %c0_i32 = arith.constant 0 : i32
    %c0_i32_0 = arith.constant 0 : i32
    %c0_i32_1 = arith.constant 0 : i32
    return %c0_i32, %c0_i32_0 : i32, i32
  }
  func.func @transform_4(%arg0: i32) -> (i32, i32) {
    %c0_i32 = arith.constant 0 : i32
    %c0_i32_0 = arith.constant 0 : i32
    return %arg0, %c0_i32 : i32, i32
  }
}

</mosaic_0001>

<llo_original>
// kernel: tpu_custom_call.1
$region0: #{tpu_custom_call.1}
  #allocation0 [shape = 'u32[]', space=smem, size = 0x4, offset = 0x4, fixed_abs, tag = 'smem constant byte address 0x4 - core index']
  #allocation1 [shape = 'u32[72,128]{1,0:T(1,128)}', space=vmem, size = 0x9000, scoped, tag = 'internal scratch']
  %s0 = inlined_call_operand.hbm [shape: f32[32,128], index: 0, kind: input, shape index: {}]
  %s1 = inlined_call_operand.hbm [shape: f32[128,128], index: 1, kind: input, shape index: {}]
  %s2 = inlined_call_operand.hbm [shape: f32[128,128], index: 2, kind: input, shape index: {}]
  %s3 = inlined_call_operand.hbm [shape: f32[8,128], index: 3, kind: input, shape index: {}]
  %s4 = inlined_call_operand.hbm [shape: f32[32,128], index: 4, kind: output, shape index: {}]
  %s5 = sld [smem:[#allocation0]]
  $region65: #{tpu_custom_call.1} parent=0
    _
  %s7 = ssub.s32 1, %s5
  %s8 = scalar_select 0, %s7, %s5
  $region1: #{tpu_custom_call.1} parent=0
    #allocation2 [shape = 'u8[16384]{0}', space=vmem, size = 0x4000, scoped, tag = 'input window, operand 0']
    #allocation3 [shape = 's32[2]{0}', space=sflag, size = 0x8, scoped, tag = 'scoped memory for tpu_custom_call.1']
    #allocation4 [shape = 's32[2]{0}', space=sflag, size = 0x8, scoped, tag = 'scoped memory for tpu_custom_call.1']
    #allocation5 [shape = 'u8[65536]{0}', space=vmem, size = 0x10000, scoped, tag = 'input window, operand 1, single buffered']
    #allocation6 [shape = 's32[1]{0}', space=sflag, size = 0x4, scoped, tag = 'scoped memory for tpu_custom_call.1']
    #allocation7 [shape = 'u8[65536]{0}', space=vmem, size = 0x10000, scoped, tag = 'input window, operand 2, single buffered']
    #allocation8 [shape = 'u8[4096]{0}', space=vmem, size = 0x1000, scoped, tag = 'input window, operand 3, single buffered']
    #allocation9 [shape = 's32[1]{0}', space=sflag, size = 0x4, scoped, tag = 'scoped memory for tpu_custom_call.1']
    #allocation10 [shape = 'u8[16384]{0}', space=vmem, size = 0x4000, scoped, tag = 'output window, operand 0']
    %9 = vsyncpa [#allocation3], 0
    %s10 = scalar_lea.sflag [#allocation3], 1
    %11 = vsyncpa %s10, 0
    %12 = vsyncpa [#allocation6], 0
    %13 = vsyncpa [#allocation9], 0
    %14 = vsyncpa [#allocation4], 0
    %s15 = scalar_lea.sflag [#allocation4], 1
    %16 = vsyncpa %s15, 0
    loop: start=0, step=1, limit=4
    $region2: #{tpu_custom_call.1} parent=1 // loop_pre_header
      _
    $region3: #{tpu_custom_call.1} parent=1 // loop_header
      %s18 = sphi 0, %s22
      %p19 = scmp.ge.s32.totalorder %s18, 4
      %s28 = sphi 0, %s30
      %s31 = sphi 0, %s28
      %s32 = sphi 0, %s31
      %s48 = sphi 0, %s32
      %s52 = sphi 0, %s52
      %s54 = sphi 0, %s52
      %s55 = sphi 0, %s54
      %s69 = sphi 0, %s55
      %s73 = sphi 0, %s73
      %s75 = sphi 0, %s73
      %s76 = sphi 0, %s75
      %s90 = sphi 0, %s76
      %s94 = sphi 0, %s94
      %s96 = sphi 0, %s94
      %s97 = sphi 0, %s96
      %s111 = sphi 0, %s97
      %s117 = sphi 0, %s119
      %s120 = sphi 0, %s117
      %s121 = sphi 0, %s120
      %s137 = sphi 0, %s121
    $region4: #{tpu_custom_call.1} parent=1 // loop_header_branch
      %21 = sbr.rel (%p19) target = $region8
    $region5: #{tpu_custom_call.1} parent=1 // loop_body
      %s23 = ssub.s32 %s18, 1
      %s24 = ssub.s32 %s18, 2
      %s25 = sadd.s32 %s18, 1
      %s26 = ssub.s32 %s18, %s25
      %p27 = scmp.eq.s32.totalorder %s26, 0
      %s29 = sadd.s32 %s28, 1
      %s30 = scalar_select %p27, %s28, %s29
      %p33 = pneg %p27
      %p34 = scmp.eq.s32.totalorder %s18, 1
      %p35 = por %p33, %p34
      %p36 = scmp.ne.s32.totalorder %s28, %s31
      %p37 = scmp.eq.s32.totalorder %s18, 0
      %p38 = por %p36, %p37
      %p39 = scmp.ne.s32.totalorder %s28, %s31
      %p40 = scmp.eq.s32.totalorder %s23, 1
      %p41 = por %p39, %p40
      %p42 = scmp.ne.s32.totalorder %s31, %s32
      %p43 = scmp.eq.s32.totalorder %s23, 0
      %p44 = por %p42, %p43
      %p45 = scmp.ne.s32.totalorder %s31, %s32
      %p46 = scmp.eq.s32.totalorder %s24, 1
      %p47 = por %p45, %p46
      %p49 = scmp.ne.s32.totalorder %s32, %s48
      %p50 = scmp.eq.s32.totalorder %s24, 0
      %p51 = por %p49, %p50
      %s53 = sadd.s32 %s52, 1
      %p56 = scmp.eq.s32.totalorder %s18, 1
      %p57 = scmp.ne.s32.totalorder %s52, %s54
      %p58 = scmp.eq.s32.totalorder %s18, 0
      %p59 = por %p57, %p58
      %p60 = scmp.ne.s32.totalorder %s52, %s54
      %p61 = scmp.eq.s32.totalorder %s23, 1
      %p62 = por %p60, %p61
      %p63 = scmp.ne.s32.totalorder %s54, %s55
      %p64 = scmp.eq.s32.totalorder %s23, 0
      %p65 = por %p63, %p64
      %p66 = scmp.ne.s32.totalorder %s54, %s55
      %p67 = scmp.eq.s32.totalorder %s24, 1
      %p68 = por %p66, %p67
      %p70 = scmp.ne.s32.totalorder %s55, %s69
      %p71 = scmp.eq.s32.totalorder %s24, 0
      %p72 = por %p70, %p71
      %s74 = sadd.s32 %s73, 1
      %p77 = scmp.eq.s32.totalorder %s18, 1
      %p78 = scmp.ne.s32.totalorder %s73, %s75
      %p79 = scmp.eq.s32.totalorder %s18, 0
      %p80 = por %p78, %p79
      %p81 = scmp.ne.s32.totalorder %s73, %s75
      %p82 = scmp.eq.s32.totalorder %s23, 1
      %p83 = por %p81, %p82
      %p84 = scmp.ne.s32.totalorder %s75, %s76
      %p85 = scmp.eq.s32.totalorder %s23, 0
      %p86 = por %p84, %p85
      %p87 = scmp.ne.s32.totalorder %s75, %s76
      %p88 = scmp.eq.s32.totalorder %s24, 1
      %p89 = por %p87, %p88
      %p91 = scmp.ne.s32.totalorder %s76, %s90
      %p92 = scmp.eq.s32.totalorder %s24, 0
      %p93 = por %p91, %p92
      %s95 = sadd.s32 %s94, 1
      %p98 = scmp.eq.s32.totalorder %s18, 1
      %p99 = scmp.ne.s32.totalorder %s94, %s96
      %p100 = scmp.eq.s32.totalorder %s18, 0
      %p101 = por %p99, %p100
      %p102 = scmp.ne.s32.totalorder %s94, %s96
      %p103 = scmp.eq.s32.totalorder %s23, 1
      %p104 = por %p102, %p103
      %p105 = scmp.ne.s32.totalorder %s96, %s97
      %p106 = scmp.eq.s32.totalorder %s23, 0
      %p107 = por %p105, %p106
      %p108 = scmp.ne.s32.totalorder %s96, %s97
      %p109 = scmp.eq.s32.totalorder %s24, 1
      %p110 = por %p108, %p109
      %p112 = scmp.ne.s32.totalorder %s97, %s111
      %p113 = scmp.eq.s32.totalorder %s24, 0
      %p114 = por %p112, %p113
      %s115 = ssub.s32 %s18, %s25
      %p116 = scmp.eq.s32.totalorder %s115, 0
      %s118 = sadd.s32 %s117, 1
      %s119 = scalar_select %p116, %s117, %s118
      %p122 = pneg %p116
      %p123 = scmp.eq.s32.totalorder %s18, 1
      %p124 = por %p122, %p123
      %p125 = scmp.ne.s32.totalorder %s117, %s120
      %p126 = scmp.eq.s32.totalorder %s18, 0
      %p127 = por %p125, %p126
      %p128 = scmp.ne.s32.totalorder %s117, %s120
      %p129 = scmp.eq.s32.totalorder %s23, 1
      %p130 = por %p128, %p129
      %p131 = scmp.ne.s32.totalorder %s120, %s121
      %p132 = scmp.eq.s32.totalorder %s23, 0
      %p133 = por %p131, %p132
      %p134 = scmp.ne.s32.totalorder %s120, %s121
      %p135 = scmp.eq.s32.totalorder %s24, 1
      %p136 = por %p134, %p135
      %p138 = scmp.ne.s32.totalorder %s121, %s137
      %p139 = scmp.eq.s32.totalorder %s24, 0
      %p140 = por %p138, %p139
      %p141 = scmp.le.s32.totalorder 1, %s18
      %p142 = scmp.lt.s32.totalorder %s18, 3
      %p143 = pnand %p141, %p142
      %p144 = pneg %p143
      // Predicated region
      $region9: #{tpu_custom_call.1} parent=5 // pred_check
        _
      $region10: #{tpu_custom_call.1} parent=5 // pred_check_branch
        %146 = sbr.rel (%p143) target = $region12
      $region11: #{tpu_custom_call.1} parent=5 // pred_region
        %s147 = ssub.s32 %s18, 1
        // Predicated region
        $region13: #{tpu_custom_call.1} parent=11 // pred_check
          %p148 = pneg %p65
        $region14: #{tpu_custom_call.1} parent=11 // pred_check_branch
          %150 = sbr.rel (%p148) target = $region16
        $region15: #{tpu_custom_call.1} parent=11 // pred_region
          %152 = vsyncadd [#allocation6], 0
          %s153 = sshll.u32 %s1, 4
          %s154 = int_to_ptr.hbm [resolvable:$true] %s153
          %s155 = sshll.u32 [#allocation5], 4
          %s156 = int_to_ptr.vmem [resolvable:$true] %s155
          %161 = dma.hbm_to_vmem [thread:$0]  %s154, 2048, %s156, [#allocation6], 128, 128, 8
        $region16: #{tpu_custom_call.1} parent=11 // pred_fallthru
          _
        // Predicated region
        $region17: #{tpu_custom_call.1} parent=11 // pred_check
          %p162 = pneg %p86
        $region18: #{tpu_custom_call.1} parent=11 // pred_check_branch
          %164 = sbr.rel (%p162) target = $region20
        $region19: #{tpu_custom_call.1} parent=11 // pred_region
          %166 = vsyncadd [#allocation6], 0
          %s167 = sshll.u32 %s2, 4
          %s168 = int_to_ptr.hbm [resolvable:$true] %s167
          %s169 = sshll.u32 [#allocation7], 4
          %s170 = int_to_ptr.vmem [resolvable:$true] %s169
          %175 = dma.hbm_to_vmem [thread:$0]  %s168, 2048, %s170, [#allocation6], 128, 128, 8
        $region20: #{tpu_custom_call.1} parent=11 // pred_fallthru
          _
        // Predicated region
        $region21: #{tpu_custom_call.1} parent=11 // pred_check
          %p176 = pneg %p107
        $region22: #{tpu_custom_call.1} parent=11 // pred_check_branch
          %178 = sbr.rel (%p176) target = $region24
        $region23: #{tpu_custom_call.1} parent=11 // pred_region
          %180 = vsyncadd [#allocation9], 0
          %s182 = sshll.u32 %s3, 4
          %s183 = int_to_ptr.hbm [resolvable:$true] %s182
          %s184 = sshll.u32 [#allocation8], 4
          %s185 = int_to_ptr.vmem [resolvable:$true] %s184
          %187 = dma.hbm_to_vmem [thread:$0]  %s183, 128, %s185, [#allocation9]
        $region24: #{tpu_custom_call.1} parent=11 // pred_fallthru
          _
      $region12: #{tpu_custom_call.1} parent=5 // pred_fallthru
        _
      %p188 = scmp.lt.s32.totalorder %s18, 2
      // Predicated region
      $region25: #{tpu_custom_call.1} parent=5 // pred_check
        %p189 = pneg %p188
      $region26: #{tpu_custom_call.1} parent=5 // pred_check_branch
        %191 = sbr.rel (%p189) target = $region28
      $region27: #{tpu_custom_call.1} parent=5 // pred_region
        // Predicated region
        $region29: #{tpu_custom_call.1} parent=27 // pred_check
          %p192 = pneg %p38
        $region30: #{tpu_custom_call.1} parent=27 // pred_check_branch
          %194 = sbr.rel (%p192) target = $region32
        $region31: #{tpu_custom_call.1} parent=27 // pred_region
          %s195 = sand.u32 %s28, 1
          %s196 = scalar_lea.sflag [#allocation3], %s195
          %s197 = sand.u32 %s28, 1
          %s198 = smul.addr %s197, 16
          %s199 = scalar_lea.vmem [#allocation2], %s198
          %s200 = smul.u32 2, %s18
          %202 = vsyncadd %s196, 0
          %s203 = smul.addr %s200, 8
          %s204 = scalar_lea.hbm %s0, %s203
          %s205 = sshll.u32 %s204, 4
          %s206 = int_to_ptr.hbm [resolvable:$true] %s205
          %s207 = sshll.u32 %s199, 4
          %s208 = int_to_ptr.vmem [resolvable:$true] %s207
          %213 = dma.hbm_to_vmem [thread:$0]  %s206, 256, %s208, %s196, 128, 128, 8
        $region32: #{tpu_custom_call.1} parent=27 // pred_fallthru
          _
      $region28: #{tpu_custom_call.1} parent=5 // pred_fallthru
        _
      %p214 = scmp.le.s32.totalorder 1, %s18
      %p215 = scmp.lt.s32.totalorder %s18, 3
      %p216 = pnand %p214, %p215
      %p217 = pneg %p216
      // Predicated region
      $region33: #{tpu_custom_call.1} parent=5 // pred_check
        _
      $region34: #{tpu_custom_call.1} parent=5 // pred_check_branch
        %219 = sbr.rel (%p216) target = $region36
      $region35: #{tpu_custom_call.1} parent=5 // pred_region
        %s220 = ssub.s32 %s18, 1
        %s221 = sand.u32 %s31, 1
        %s222 = scalar_lea.sflag [#allocation3], %s221
        %s223 = sand.u32 %s31, 1
        %s224 = smul.addr %s223, 16
        %s225 = scalar_lea.vmem [#allocation2], %s224
        // Predicated region
        $region37: #{tpu_custom_call.1} parent=35 // pred_check
          %p226 = pneg %p44
        $region38: #{tpu_custom_call.1} parent=35 // pred_check_branch
          %228 = sbr.rel (%p226) target = $region40
        $region39: #{tpu_custom_call.1} parent=35 // pred_region
          %230 = dma.done %s222, 256
        $region40: #{tpu_custom_call.1} parent=35 // pred_fallthru
          _
        // Predicated region
        $region41: #{tpu_custom_call.1} parent=35 // pred_check
          %p231 = pneg %p65
        $region42: #{tpu_custom_call.1} parent=35 // pred_check_branch
          %233 = sbr.rel (%p231) target = $region44
        $region43: #{tpu_custom_call.1} parent=35 // pred_region
          %235 = dma.done [#allocation6], 2048
        $region44: #{tpu_custom_call.1} parent=35 // pred_fallthru
          _
        // Predicated region
        $region45: #{tpu_custom_call.1} parent=35 // pred_check
          %p236 = pneg %p86
        $region46: #{tpu_custom_call.1} parent=35 // pred_check_branch
          %238 = sbr.rel (%p236) target = $region48
        $region47: #{tpu_custom_call.1} parent=35 // pred_region
          %240 = dma.done [#allocation6], 2048
        $region48: #{tpu_custom_call.1} parent=35 // pred_fallthru
          _
        // Predicated region
        $region49: #{tpu_custom_call.1} parent=35 // pred_check
          %p241 = pneg %p107
        $region50: #{tpu_custom_call.1} parent=35 // pred_check_branch
          %243 = sbr.rel (%p241) target = $region52
        $region51: #{tpu_custom_call.1} parent=35 // pred_region
          %245 = dma.done [#allocation9], 128
        $region52: #{tpu_custom_call.1} parent=35 // pred_fallthru
          _
        %s246 = sand.u32 %s31, 1
        %s247 = scalar_lea.sflag [#allocation3], %s246
        %s248 = sand.u32 %s31, 1
        %s249 = smul.addr %s248, 16
        %s250 = scalar_lea.vmem [#allocation2], %s249
        %p251 = pneg %p44
        %p252 = pneg %p41
        %p253 = pneg %p65
        %p254 = pneg %p62
        %p255 = pneg %p86
        %p256 = pneg %p83
        %p257 = pneg %p107
        %p258 = pneg %p104
        %p259 = pneg %p133
        %p260 = pneg %p130
        %s261 = sand.u32 %s120, 1
        %s262 = scalar_lea.sflag [#allocation4], %s261
        %s263 = sand.u32 %s120, 1
        %s264 = smul.addr %s263, 16
        %s265 = scalar_lea.vmem [#allocation10], %s264
        %s266 = smul.u32 2, %s23
        %s267 = smul.u32 2, %s23
        %v268 = vld [vmem:[#allocation8] sm:$0x1]
        %v269 = vld [vmem:[#allocation8 + $0x1] sm:$0x1]
        %v270 = vld [vmem:[#allocation8 + $0x2] sm:$0x1]
        %v271 = vld [vmem:[#allocation8 + $0x3] sm:$0x1]
        %v272 = vld [vmem:[#allocation8 + $0x4] sm:$0x1]
        %v273 = vld [vmem:[#allocation8 + $0x5] sm:$0x1]
        %v274 = vld [vmem:[#allocation8 + $0x6] sm:$0x1]
        %v275 = vld [vmem:[#allocation8 + $0x7] sm:$0x1]
        %v276 = vld [vmem:[%s225] sm:$0xff]
        %v277 = vld [vmem:[%s225 + $0x8] sm:$0xff]
        %v278 = vld [vmem:[#allocation5] sm:$0xff]
        %v279 = vld [vmem:[#allocation5 + $0x8] sm:$0xff]
        %v280 = vld [vmem:[#allocation5 + $0x10] sm:$0xff]
        %v281 = vld [vmem:[#allocation5 + $0x18] sm:$0xff]
        %v282 = vld [vmem:[#allocation5 + $0x20] sm:$0xff]
        %v283 = vld [vmem:[#allocation5 + $0x28] sm:$0xff]
        %v284 = vld [vmem:[#allocation5 + $0x30] sm:$0xff]
        %v285 = vld [vmem:[#allocation5 + $0x38] sm:$0xff]
        %v286 = vld [vmem:[#allocation5 + $0x40] sm:$0xff]
        %v287 = vld [vmem:[#allocation5 + $0x48] sm:$0xff]
        %v288 = vld [vmem:[#allocation5 + $0x50] sm:$0xff]
        %v289 = vld [vmem:[#allocation5 + $0x58] sm:$0xff]
        %v290 = vld [vmem:[#allocation5 + $0x60] sm:$0xff]
        %v291 = vld [vmem:[#allocation5 + $0x68] sm:$0xff]
        %v292 = vld [vmem:[#allocation5 + $0x70] sm:$0xff]
        %v293 = vld [vmem:[#allocation5 + $0x78] sm:$0xff]
        %v294 = vperm.slane %v268, 0
        %295 = vmatpush.msra.mxu0 %v293
        %296 = vmatpush.msra.mxu0 %v292
        %297 = vmatpush.msra.mxu0 %v291
        %298 = vmatpush.msra.mxu0 %v290
        %299 = vmatpush.msra.mxu0 %v289
        %300 = vmatpush.msra.mxu0 %v288
        %301 = vmatpush.msra.mxu0 %v287
        %302 = vmatpush.msra.mxu0 %v286
        %303 = vmatpush.msra.mxu0 %v285
        %304 = vmatpush.msra.mxu0 %v284
        %305 = vmatpush.msra.mxu0 %v283
        %306 = vmatpush.msra.mxu0 %v282
        %307 = vmatpush.msra.mxu0 %v281
        %308 = vmatpush.msra.mxu0 %v280
        %309 = vmatpush.msra.mxu0 %v279
        %310 = vmatpush.msra.mxu0 %v278
        %311 = vmatmul.f32.gmra.mxu0 %v276
        %v312 = vpop.f32.mrf.mxu0
        %v313 = vadd.f32 %v294, %v312
        %314 = vmatmul.f32.gmra.mxu0 %v277
        %v315 = vpop.f32.mrf.mxu0
        %v316 = vadd.f32 %v294, %v315
        %317 = vdwg.mxu0
        %318 = vadd.xlane.f32.xlu0 %v313
        %v319 = vpop.xlane.xlu0 %318
        %320 = vadd.xlane.f32.xlu0 %v316
        %v321 = vpop.xlane.xlu0 %320
        %v322 = vrcp.pop 128.0
        %v323 = vmul.f32 128.0, %v322
        %v324 = vsub.f32 1.0, %v323
        %v325 = vmul.f32 %v322, %v324
        %v326 = vadd.f32 %v322, %v325
        %vm327 = vweird.f32 %v322
        %v328 = vsel %vm327, %v322, %v326
        %v329 = vmul.f32 %v319, %v328
        %v330 = vmul.f32 %v321, %v328
        %v331 = vmul.f32 %v313, %v313
        %v332 = vmul.f32 %v316, %v316
        %333 = vadd.xlane.f32.xlu0 %v331
        %v334 = vpop.xlane.xlu0 %333
        %335 = vadd.xlane.f32.xlu0 %v332
        %v336 = vpop.xlane.xlu0 %335
        %v337 = vmul.f32 %v334, %v328
        %v338 = vmul.f32 %v336, %v328
        %v339 = vmul.f32 %v329, %v329
        %v340 = vmul.f32 %v330, %v330
        %v341 = vsub.f32 %v337, %v339
        %v342 = vsub.f32 %v338, %v340
        %v343 = vmax.f32 %v341, 0.0
        %v344 = vmax.f32 %v342, 0.0
        %v345 = vsub.f32 %v313, %v329
        %v346 = vsub.f32 %v316, %v330
        %v347 = vadd.f32 %v343, 1e-05
        %v348 = vadd.f32 %v344, 1e-05
        %v349 = vrsqrt.pop %v347
        %v350 = vmul.f32 %v349, %v347
        %v351 = vmul.f32 %v350, %v349
        %v352 = vmul.f32 0.5, %v351
        %v353 = vsub.f32 1.5, %v352
        %v354 = vmul.f32 %v349, %v353
        %vm355 = vweird.f32 %v347
        %vm356 = vweird.f32 %v349
        %vm357 = vmor %vm355, %vm356
        %v358 = vsel %vm357, %v349, %v354
        %v359 = vrsqrt.pop %v348
        %v360 = vmul.f32 %v359, %v348
        %v361 = vmul.f32 %v360, %v359
        %v362 = vmul.f32 0.5, %v361
        %v363 = vsub.f32 1.5, %v362
        %v364 = vmul.f32 %v359, %v363
        %vm365 = vweird.f32 %v348
        %vm366 = vweird.f32 %v359
        %vm367 = vmor %vm365, %vm366
        %v368 = vsel %vm367, %v359, %v364
        %v369 = vmul.f32 %v345, %v358
        %v370 = vmul.f32 %v346, %v368
        %v371 = vperm.slane %v270, 0
        %v372 = vmul.f32 %v369, %v371
        %v373 = vmul.f32 %v370, %v371
        %v374 = vperm.slane %v271, 0
        %v375 = vadd.f32 %v372, %v374
        %v376 = vadd.f32 %v373, %v374
        %v377 = vmul.f32 %v375, 0.5
        %v378 = vmul.f32 %v376, 0.5
        %v379 = vmul.f32 %v375, 0.70710677
        %v380 = vmul.f32 %v376, 0.70710677
        %v381 = vmul.f32 %v379, %v379
        %v382 = vmin.f32 16.0, %v381
        %v383 = vmul.f32 %v382, 2.1237322e-06
        %v384 = vadd.f32 %v383, 0.00028619796
        %v385 = vmul.f32 %v382, %v384
        %v386 = vadd.f32 %v385, 0.0036580483
        %v387 = vmul.f32 %v382, %v386
        %v388 = vadd.f32 %v387, 0.05243302
        %v389 = vmul.f32 %v382, %v388
        %v390 = vadd.f32 %v389, 0.18741608
        %v391 = vmul.f32 %v382, %v390
        %v392 = vadd.f32 %v391, 1.1283791
        %v393 = vmul.f32 %v379, %v392
        %v394 = vmul.f32 %v382, 3.8918573e-05
        %v395 = vadd.f32 %v394, 0.001143296
        %v396 = vmul.f32 %v382, %v395
        %v397 = vadd.f32 %v396, 0.014752088
        %v398 = vmul.f32 %v382, %v397
        %v399 = vadd.f32 %v398, 0.112945676
        %v400 = vmul.f32 %v382, %v399
        %v401 = vadd.f32 %v400, 0.4994258
        %v402 = vmul.f32 %v382, %v401
        %v403 = vadd.f32 %v402, 1.0
        %v404 = vrcp.pop %v403
        %v405 = vmul.f32 %v403, %v404
        %v406 = vsub.f32 1.0, %v405
        %v407 = vmul.f32 %v404, %v406
        %v408 = vadd.f32 %v404, %v407
        %vm409 = vweird.f32 %v403
        %vm410 = vweird.f32 %v404
        %vm411 = vmor %vm409, %vm410
        %v412 = vsel %vm411, %v404, %v408
        %v413 = vand.u32 2147483647, %v403
        %vm414 = vcmp.eq.f32.partialorder %v413, 8.507059e+37
        %v415 = vand.u32 %v403, 2147483648
        %v416 = vor.u32 1.1754944e-38, %v415
        %v417 = vsel %vm414, %v416, %v412
        %v418 = vmul.f32 %v393, %v417
        %v419 = vmin.f32 %v418, 1.0
        %v420 = vmax.f32 %v419, -1.0
        %v421 = vmul.f32 %v380, %v380
        %v422 = vmin.f32 16.0, %v421
        %v423 = vmul.f32 %v422, 2.1237322e-06
        %v424 = vadd.f32 %v423, 0.00028619796
        %v425 = vmul.f32 %v422, %v424
        %v426 = vadd.f32 %v425, 0.0036580483
        %v427 = vmul.f32 %v422, %v426
        %v428 = vadd.f32 %v427, 0.05243302
        %v429 = vmul.f32 %v422, %v428
        %v430 = vadd.f32 %v429, 0.18741608
        %v431 = vmul.f32 %v422, %v430
        %v432 = vadd.f32 %v431, 1.1283791
        %v433 = vmul.f32 %v380, %v432
        %v434 = vmul.f32 %v422, 3.8918573e-05
        %v435 = vadd.f32 %v434, 0.001143296
        %v436 = vmul.f32 %v422, %v435
        %v437 = vadd.f32 %v436, 0.014752088
        %v438 = vmul.f32 %v422, %v437
        %v439 = vadd.f32 %v438, 0.112945676
        %v440 = vmul.f32 %v422, %v439
        %v441 = vadd.f32 %v440, 0.4994258
        %v442 = vmul.f32 %v422, %v441
        %v443 = vadd.f32 %v442, 1.0
        %v444 = vrcp.pop %v443
        %v445 = vmul.f32 %v443, %v444
        %v446 = vsub.f32 1.0, %v445
        %v447 = vmul.f32 %v444, %v446
        %v448 = vadd.f32 %v444, %v447
        %vm449 = vweird.f32 %v443
        %vm450 = vweird.f32 %v444
        %vm451 = vmor %vm449, %vm450
        %v452 = vsel %vm451, %v444, %v448
        %v453 = vand.u32 2147483647, %v443
        %vm454 = vcmp.eq.f32.partialorder %v453, 8.507059e+37
        %v455 = vand.u32 %v443, 2147483648
        %v456 = vor.u32 1.1754944e-38, %v455
        %v457 = vsel %vm454, %v456, %v452
        %v458 = vmul.f32 %v433, %v457
        %v459 = vmin.f32 %v458, 1.0
        %v460 = vmax.f32 %v459, -1.0
        %v461 = vadd.f32 %v420, 1.0
        %v462 = vadd.f32 %v460, 1.0
        %v463 = vmul.f32 %v377, %v461
        %v464 = vmul.f32 %v378, %v462
        %v465 = vld [vmem:[#allocation7] sm:$0xff]
        %v466 = vld [vmem:[#allocation7 + $0x8] sm:$0xff]
        %v467 = vld [vmem:[#allocation7 + $0x10] sm:$0xff]
        %v468 = vld [vmem:[#allocation7 + $0x18] sm:$0xff]
        %v469 = vld [vmem:[#allocation7 + $0x20] sm:$0xff]
        %v470 = vld [vmem:[#allocation7 + $0x28] sm:$0xff]
        %v471 = vld [vmem:[#allocation7 + $0x30] sm:$0xff]
        %v472 = vld [vmem:[#allocation7 + $0x38] sm:$0xff]
        %v473 = vld [vmem:[#allocation7 + $0x40] sm:$0xff]
        %v474 = vld [vmem:[#allocation7 + $0x48] sm:$0xff]
        %v475 = vld [vmem:[#allocation7 + $0x50] sm:$0xff]
        %v476 = vld [vmem:[#allocation7 + $0x58] sm:$0xff]
        %v477 = vld [vmem:[#allocation7 + $0x60] sm:$0xff]
        %v478 = vld [vmem:[#allocation7 + $0x68] sm:$0xff]
        %v479 = vld [vmem:[#allocation7 + $0x70] sm:$0xff]
        %v480 = vld [vmem:[#allocation7 + $0x78] sm:$0xff]
        %v481 = vperm.slane %v269, 0
        %482 = vmatpush.msra.mxu0 %v480
        %483 = vmatpush.msra.mxu0 %v479
        %484 = vmatpush.msra.mxu0 %v478
        %485 = vmatpush.msra.mxu0 %v477
        %486 = vmatpush.msra.mxu0 %v476
        %487 = vmatpush.msra.mxu0 %v475
        %488 = vmatpush.msra.mxu0 %v474
        %489 = vmatpush.msra.mxu0 %v473
        %490 = vmatpush.msra.mxu0 %v472
        %491 = vmatpush.msra.mxu0 %v471
        %492 = vmatpush.msra.mxu0 %v470
        %493 = vmatpush.msra.mxu0 %v469
        %494 = vmatpush.msra.mxu0 %v468
        %495 = vmatpush.msra.mxu0 %v467
        %496 = vmatpush.msra.mxu0 %v466
        %497 = vmatpush.msra.mxu0 %v465
        %498 = vmatmul.f32.gmra.mxu0 %v463
        %v499 = vpop.f32.mrf.mxu0
        %v500 = vadd.f32 %v481, %v499
        %501 = vmatmul.f32.gmra.mxu0 %v464
        %v502 = vpop.f32.mrf.mxu0
        %v503 = vadd.f32 %v481, %v502
        %504 = vdwg.mxu0
        %505 = vadd.xlane.f32.xlu0 %v500
        %v506 = vpop.xlane.xlu0 %505
        %507 = vadd.xlane.f32.xlu0 %v503
        %v508 = vpop.xlane.xlu0 %507
        %v509 = vmul.f32 %v506, %v328
        %v510 = vmul.f32 %v508, %v328
        %v511 = vmul.f32 %v500, %v500
        %v512 = vmul.f32 %v503, %v503
        %513 = vadd.xlane.f32.xlu0 %v511
        %v514 = vpop.xlane.xlu0 %513
        %515 = vadd.xlane.f32.xlu0 %v512
        %v516 = vpop.xlane.xlu0 %515
        %v517 = vmul.f32 %v514, %v328
        %v518 = vmul.f32 %v516, %v328
        %v519 = vmul.f32 %v509, %v509
        %v520 = vmul.f32 %v510, %v510
        %v521 = vsub.f32 %v517, %v519
        %v522 = vsub.f32 %v518, %v520
        %v523 = vmax.f32 %v521, 0.0
        %v524 = vmax.f32 %v522, 0.0
        %v525 = vsub.f32 %v500, %v509
        %v526 = vsub.f32 %v503, %v510
        %v527 = vadd.f32 %v523, 1e-05
        %v528 = vadd.f32 %v524, 1e-05
        %v529 = vrsqrt.pop %v527
        %v530 = vmul.f32 %v529, %v527
        %v531 = vmul.f32 %v530, %v529
        %v532 = vmul.f32 0.5, %v531
        %v533 = vsub.f32 1.5, %v532
        %v534 = vmul.f32 %v529, %v533
        %vm535 = vweird.f32 %v527
        %vm536 = vweird.f32 %v529
        %vm537 = vmor %vm535, %vm536
        %v538 = vsel %vm537, %v529, %v534
        %v539 = vrsqrt.pop %v528
        %v540 = vmul.f32 %v539, %v528
        %v541 = vmul.f32 %v540, %v539
        %v542 = vmul.f32 0.5, %v541
        %v543 = vsub.f32 1.5, %v542
        %v544 = vmul.f32 %v539, %v543
        %vm545 = vweird.f32 %v528
        %vm546 = vweird.f32 %v539
        %vm547 = vmor %vm545, %vm546
        %v548 = vsel %vm547, %v539, %v544
        %v549 = vmul.f32 %v525, %v538
        %v550 = vmul.f32 %v526, %v548
        %v551 = vperm.slane %v272, 0
        %v552 = vmul.f32 %v549, %v551
        %v553 = vmul.f32 %v550, %v551
        %v554 = vperm.slane %v273, 0
        %v555 = vadd.f32 %v552, %v554
        %v556 = vadd.f32 %v553, %v554
        %v557 = vadd.f32 %v555, %v276
        %v558 = vadd.f32 %v556, %v277
        %559 = vadd.xlane.f32.xlu0 %v557
        %v560 = vpop.xlane.xlu0 %559
        %561 = vadd.xlane.f32.xlu0 %v558
        %v562 = vpop.xlane.xlu0 %561
        %v563 = vmul.f32 %v560, %v328
        %v564 = vmul.f32 %v562, %v328
        %v565 = vmul.f32 %v557, %v557
        %v566 = vmul.f32 %v558, %v558
        %567 = vadd.xlane.f32.xlu0 %v565
        %v568 = vpop.xlane.xlu0 %567
        %569 = vadd.xlane.f32.xlu0 %v566
        %v570 = vpop.xlane.xlu0 %569
        %v571 = vmul.f32 %v568, %v328
        %v572 = vmul.f32 %v570, %v328
        %v573 = vmul.f32 %v563, %v563
        %v574 = vmul.f32 %v564, %v564
        %v575 = vsub.f32 %v571, %v573
        %v576 = vsub.f32 %v572, %v574
        %v577 = vmax.f32 %v575, 0.0
        %v578 = vmax.f32 %v576, 0.0
        %v579 = vsub.f32 %v557, %v563
        %v580 = vsub.f32 %v558, %v564
        %v581 = vadd.f32 %v577, 1e-05
        %v582 = vadd.f32 %v578, 1e-05
        %v583 = vrsqrt.pop %v581
        %v584 = vmul.f32 %v583, %v581
        %v585 = vmul.f32 %v584, %v583
        %v586 = vmul.f32 0.5, %v585
        %v587 = vsub.f32 1.5, %v586
        %v588 = vmul.f32 %v583, %v587
        %vm589 = vweird.f32 %v581
        %vm590 = vweird.f32 %v583
        %vm591 = vmor %vm589, %vm590
        %v592 = vsel %vm591, %v583, %v588
        %v593 = vrsqrt.pop %v582
        %v594 = vmul.f32 %v593, %v582
        %v595 = vmul.f32 %v594, %v593
        %v596 = vmul.f32 0.5, %v595
        %v597 = vsub.f32 1.5, %v596
        %v598 = vmul.f32 %v593, %v597
        %vm599 = vweird.f32 %v582
        %vm600 = vweird.f32 %v593
        %vm601 = vmor %vm599, %vm600
        %v602 = vsel %vm601, %v593, %v598
        %v603 = vmul.f32 %v579, %v592
        %v604 = vmul.f32 %v580, %v602
        %v605 = vperm.slane %v274, 0
        %v606 = vmul.f32 %v603, %v605
        %v607 = vmul.f32 %v604, %v605
        %v608 = vperm.slane %v275, 0
        %v609 = vadd.f32 %v606, %v608
        %v610 = vadd.f32 %v607, %v608
        %v611 = vmul.f32 %v609, 0.5
        %v612 = vmul.f32 %v610, 0.5
        %v613 = vmul.f32 %v609, 0.70710677
        %v614 = vmul.f32 %v610, 0.70710677
        %v615 = vmul.f32 %v613, %v613
        %v616 = vmin.f32 16.0, %v615
        %v617 = vmul.f32 %v616, 2.1237322e-06
        %v618 = vadd.f32 %v617, 0.00028619796
        %v619 = vmul.f32 %v616, %v618
        %v620 = vadd.f32 %v619, 0.0036580483
        %v621 = vmul.f32 %v616, %v620
        %v622 = vadd.f32 %v621, 0.05243302
        %v623 = vmul.f32 %v616, %v622
        %v624 = vadd.f32 %v623, 0.18741608
        %v625 = vmul.f32 %v616, %v624
        %v626 = vadd.f32 %v625, 1.1283791
        %v627 = vmul.f32 %v613, %v626
        %v628 = vmul.f32 %v616, 3.8918573e-05
        %v629 = vadd.f32 %v628, 0.001143296
        %v630 = vmul.f32 %v616, %v629
        %v631 = vadd.f32 %v630, 0.014752088
        %v632 = vmul.f32 %v616, %v631
        %v633 = vadd.f32 %v632, 0.112945676
        %v634 = vmul.f32 %v616, %v633
        %v635 = vadd.f32 %v634, 0.4994258
        %v636 = vmul.f32 %v616, %v635
        %v637 = vadd.f32 %v636, 1.0
        %v638 = vrcp.pop %v637
        %v639 = vmul.f32 %v637, %v638
        %v640 = vsub.f32 1.0, %v639
        %v641 = vmul.f32 %v638, %v640
        %v642 = vadd.f32 %v638, %v641
        %vm643 = vweird.f32 %v637
        %vm644 = vweird.f32 %v638
        %vm645 = vmor %vm643, %vm644
        %v646 = vsel %vm645, %v638, %v642
        %v647 = vand.u32 2147483647, %v637
        %vm648 = vcmp.eq.f32.partialorder %v647, 8.507059e+37
        %v649 = vand.u32 %v637, 2147483648
        %v650 = vor.u32 1.1754944e-38, %v649
        %v651 = vsel %vm648, %v650, %v646
        %v652 = vmul.f32 %v627, %v651
        %v653 = vmin.f32 %v652, 1.0
        %v654 = vmax.f32 %v653, -1.0
        %v655 = vmul.f32 %v614, %v614
        %v656 = vmin.f32 16.0, %v655
        %v657 = vmul.f32 %v656, 2.1237322e-06
        %v658 = vadd.f32 %v657, 0.00028619796
        %v659 = vmul.f32 %v656, %v658
        %v660 = vadd.f32 %v659, 0.0036580483
        %v661 = vmul.f32 %v656, %v660
        %v662 = vadd.f32 %v661, 0.05243302
        %v663 = vmul.f32 %v656, %v662
        %v664 = vadd.f32 %v663, 0.18741608
        %v665 = vmul.f32 %v656, %v664
        %v666 = vadd.f32 %v665, 1.1283791
        %v667 = vmul.f32 %v614, %v666
        %v668 = vmul.f32 %v656, 3.8918573e-05
        %v669 = vadd.f32 %v668, 0.001143296
        %v670 = vmul.f32 %v656, %v669
        %v671 = vadd.f32 %v670, 0.014752088
        %v672 = vmul.f32 %v656, %v671
        %v673 = vadd.f32 %v672, 0.112945676
        %v674 = vmul.f32 %v656, %v673
        %v675 = vadd.f32 %v674, 0.4994258
        %v676 = vmul.f32 %v656, %v675
        %v677 = vadd.f32 %v676, 1.0
        %v678 = vrcp.pop %v677
        %v679 = vmul.f32 %v677, %v678
        %v680 = vsub.f32 1.0, %v679
        %v681 = vmul.f32 %v678, %v680
        %v682 = vadd.f32 %v678, %v681
        %vm683 = vweird.f32 %v677
        %vm684 = vweird.f32 %v678
        %vm685 = vmor %vm683, %vm684
        %v686 = vsel %vm685, %v678, %v682
        %v687 = vand.u32 2147483647, %v677
        %vm688 = vcmp.eq.f32.partialorder %v687, 8.507059e+37
        %v689 = vand.u32 %v677, 2147483648
        %v690 = vor.u32 1.1754944e-38, %v689
        %v691 = vsel %vm688, %v690, %v686
        %v692 = vmul.f32 %v667, %v691
        %v693 = vmin.f32 %v692, 1.0
        %v694 = vmax.f32 %v693, -1.0
        %v695 = vadd.f32 %v654, 1.0
        %v696 = vadd.f32 %v694, 1.0
        %v697 = vmul.f32 %v611, %v695
        %v698 = vmul.f32 %v612, %v696
        %699 = vst [vmem:[%s265] sm:$0xff] %v697
        %700 = vst [vmem:[%s265 + $0x8] sm:$0xff] %v698
        %s701 = sand.u32 %s120, 1
        %s702 = scalar_lea.sflag [#allocation4], %s701
        %s703 = sand.u32 %s120, 1
        %s704 = smul.addr %s703, 16
        %s705 = scalar_lea.vmem [#allocation10], %s704
        // Predicated region
        $region53: #{tpu_custom_call.1} parent=35 // pred_check
          %p706 = pneg %p130
        $region54: #{tpu_custom_call.1} parent=35 // pred_check_branch
          %708 = sbr.rel (%p706) target = $region56
        $region55: #{tpu_custom_call.1} parent=35 // pred_region
          %s709 = smul.u32 2, %s23
          %711 = vsyncadd %s702, 0
          %s712 = smul.addr %s709, 8
          %s713 = scalar_lea.hbm %s4, %s712
          %s714 = sshll.u32 %s705, 4
          %s715 = int_to_ptr.vmem [resolvable:$true] %s714
          %s716 = sshll.u32 %s713, 4
          %s717 = int_to_ptr.hbm [resolvable:$true] %s716
          %722 = dma.vmem_to_hbm [thread:$0]  %s715, 256, %s717, %s702, 128, 128, 8
        $region56: #{tpu_custom_call.1} parent=35 // pred_fallthru
          _
      $region36: #{tpu_custom_call.1} parent=5 // pred_fallthru
        _
      %p723 = scmp.le.s32.totalorder 2, %s18
      // Predicated region
      $region57: #{tpu_custom_call.1} parent=5 // pred_check
        %p724 = pneg %p723
      $region58: #{tpu_custom_call.1} parent=5 // pred_check_branch
        %726 = sbr.rel (%p724) target = $region60
      $region59: #{tpu_custom_call.1} parent=5 // pred_region
        %s727 = ssub.s32 %s18, 2
        // Predicated region
        $region61: #{tpu_custom_call.1} parent=59 // pred_check
          %p728 = pneg %p136
        $region62: #{tpu_custom_call.1} parent=59 // pred_check_branch
          %730 = sbr.rel (%p728) target = $region64
        $region63: #{tpu_custom_call.1} parent=59 // pred_region
          %s731 = sand.u32 %s121, 1
          %s732 = scalar_lea.sflag [#allocation4], %s731
          %s733 = sand.u32 %s121, 1
          %s734 = smul.addr %s733, 16
          %s735 = scalar_lea.vmem [#allocation10], %s734
          %737 = dma.done %s732, 256
        $region64: #{tpu_custom_call.1} parent=59 // pred_fallthru
          _
      $region60: #{tpu_custom_call.1} parent=5 // pred_fallthru
        _
    $region6: #{tpu_custom_call.1} parent=1 // loop_footer
      %s22 = sadd.s32 1, %s18
    $region7: #{tpu_custom_call.1} parent=1 // loop_footer_branch
      %17 = sbr.rel target = $region3
    $region8: #{tpu_custom_call.1} parent=1 // loop_exit
      _
    %738 = vsyncpa [#allocation3], 1
    %s739 = scalar_lea.sflag [#allocation3], 1
    %740 = vsyncpa %s739, 1
    %741 = vsyncpa [#allocation6], 1
    %742 = vsyncpa [#allocation9], 1
    %743 = vsyncpa [#allocation4], 1
    %s744 = scalar_lea.sflag [#allocation4], 1
    %745 = vsyncpa %s744, 1

// kernel: tpu_custom_call.1
$region0: #{tpu_custom_call.1}
  #allocation0 [shape = 'u32[]', space=smem, size = 0x4, offset = 0x4, fixed_abs, tag = 'smem constant byte address 0x4 - core index']
  #allocation1 [shape = 'u32[72,128]{1,0:T(1,128)}', space=vmem, size = 0x9000, scoped, tag = 'internal scratch']
  %s0 = inlined_call_operand.hbm [shape: f32[32,128], index: 0, kind: input, shape index: {}]
  %s1 = inlined_call_operand.hbm [shape: f32[128,128], index: 1, kind: input, shape index: {}]
  %s2 = inlined_call_operand.hbm [shape: f32[128,128], index: 2, kind: input, shape index: {}]
  %s3 = inlined_call_operand.hbm [shape: f32[8,128], index: 3, kind: input, shape index: {}]
  %s4 = inlined_call_operand.hbm [shape: f32[32,128], index: 4, kind: output, shape index: {}]
  %s5 = sld [smem:[#allocation0]]
  $region65: #{tpu_custom_call.1} parent=0
    _
  %s7 = ssub.s32 1, %s5
  %s8 = scalar_select 0, %s7, %s5
  $region1: #{tpu_custom_call.1} parent=0
    #allocation2 [shape = 'u8[16384]{0}', space=vmem, size = 0x4000, scoped, tag = 'input window, operand 0']
    #allocation3 [shape = 's32[2]{0}', space=sflag, size = 0x8, scoped, tag = 'scoped memory for tpu_custom_call.1']
    #allocation4 [shape = 's32[2]{0}', space=sflag, size = 0x8, scoped, tag = 'scoped memory for tpu_custom_call.1']
    #allocation5 [shape = 'u8[65536]{0}', space=vmem, size = 0x10000, scoped, tag = 'input window, operand 1, single buffered']
    #allocation6 [shape = 's32[1]{0}', space=sflag, size = 0x4, scoped, tag = 'scoped memory for tpu_custom_call.1']
    #allocation7 [shape = 'u8[65536]{0}', space=vmem, size = 0x10000, scoped, tag = 'input window, operand 2, single buffered']
    #allocation8 [shape = 'u8[4096]{0}', space=vmem, size = 0x1000, scoped, tag = 'input window, operand 3, single buffered']
    #allocation9 [shape = 's32[1]{0}', space=sflag, size = 0x4, scoped, tag = 'scoped memory for tpu_custom_call.1']
    #allocation10 [shape = 'u8[16384]{0}', space=vmem, size = 0x4000, scoped, tag = 'output window, operand 0']
    %9 = vsyncpa [#allocation3], 0
    %s10 = scalar_lea.sflag [#allocation3], 1
    %11 = vsyncpa %s10, 0
    %12 = vsyncpa [#allocation6], 0
    %13 = vsyncpa [#allocation9], 0
    %14 = vsyncpa [#allocation4], 0
    %s15 = scalar_lea.sflag [#allocation4], 1
    %16 = vsyncpa %s15, 0
    loop: start=0, step=1, limit=4
    $region2: #{tpu_custom_call.1} parent=1 // loop_pre_header
      _
    $region3: #{tpu_custom_call.1} parent=1 // loop_header
      %s18 = sphi 0, %s22
      %p19 = scmp.ge.s32.totalorder %s18, 4
      %s28 = sphi 0, %s30
      %s31 = sphi 0, %s28
      %s32 = sphi 0, %s31
      %s48 = sphi 0, %s32
      %s52 = sphi 0, %s52
      %s54 = sphi 0, %s52
      %s55 = sphi 0, %s54
      %s69 = sphi 0, %s55
      %s73 = sphi 0, %s73
      %s75 = sphi 0, %s73
      %s76 = sphi 0, %s75
      %s90 = sphi 0, %s76
      %s94 = sphi 0, %s94
      %s96 = sphi 0, %s94
      %s97 = sphi 0, %s96
      %s111 = sphi 0, %s97
      %s117 = sphi 0, %s119
      %s120 = sphi 0, %s117
      %s121 = sphi 0, %s120
      %s137 = sphi 0, %s121
    $region4: #{tpu_custom_call.1} parent=1 // loop_header_branch
      %21 = sbr.rel (%p19) target = $region8
    $region5: #{tpu_custom_call.1} parent=1 // loop_body
      %s23 = ssub.s32 %s18, 1
      %s24 = ssub.s32 %s18, 2
      %s25 = sadd.s32 %s18, 1
      %s26 = ssub.s32 %s18, %s25
      %p27 = scmp.eq.s32.totalorder %s26, 0
      %s29 = sadd.s32 %s28, 1
      %s30 = scalar_select %p27, %s28, %s29
      %p33 = pneg %p27
      %p34 = scmp.eq.s32.totalorder %s18, 1
      %p35 = por %p33, %p34
      %p36 = scmp.ne.s32.totalorder %s28, %s31
      %p37 = scmp.eq.s32.totalorder %s18, 0
      %p38 = por %p36, %p37
      %p39 = scmp.ne.s32.totalorder %s28, %s31
      %p40 = scmp.eq.s32.totalorder %s23, 1
      %p41 = por %p39, %p40
      %p42 = scmp.ne.s32.totalorder %s31, %s32
      %p43 = scmp.eq.s32.totalorder %s23, 0
      %p44 = por %p42, %p43
      %p45 = scmp.ne.s32.totalorder %s31, %s32
      %p46 = scmp.eq.s32.totalorder %s24, 1
      %p47 = por %p45, %p46
      %p49 = scmp.ne.s32.totalorder %s32, %s48
      %p50 = scmp.eq.s32.totalorder %s24, 0
      %p51 = por %p49, %p50
      %s53 = sadd.s32 %s52, 1
      %p56 = scmp.eq.s32.totalorder %s18, 1
      %p57 = scmp.ne.s32.totalorder %s52, %s54
      %p58 = scmp.eq.s32.totalorder %s18, 0
      %p59 = por %p57, %p58
      %p60 = scmp.ne.s32.totalorder %s52, %s54
      %p61 = scmp.eq.s32.totalorder %s23, 1
      %p62 = por %p60, %p61
      %p63 = scmp.ne.s32.totalorder %s54, %s55
      %p64 = scmp.eq.s32.totalorder %s23, 0
      %p65 = por %p63, %p64
      %p66 = scmp.ne.s32.totalorder %s54, %s55
      %p67 = scmp.eq.s32.totalorder %s24, 1
      %p68 = por %p66, %p67
      %p70 = scmp.ne.s32.totalorder %s55, %s69
      %p71 = scmp.eq.s32.totalorder %s24, 0
      %p72 = por %p70, %p71
      %s74 = sadd.s32 %s73, 1
      %p77 = scmp.eq.s32.totalorder %s18, 1
      %p78 = scmp.ne.s32.totalorder %s73, %s75
      %p79 = scmp.eq.s32.totalorder %s18, 0
      %p80 = por %p78, %p79
      %p81 = scmp.ne.s32.totalorder %s73, %s75
      %p82 = scmp.eq.s32.totalorder %s23, 1
      %p83 = por %p81, %p82
      %p84 = scmp.ne.s32.totalorder %s75, %s76
      %p85 = scmp.eq.s32.totalorder %s23, 0
      %p86 = por %p84, %p85
      %p87 = scmp.ne.s32.totalorder %s75, %s76
      %p88 = scmp.eq.s32.totalorder %s24, 1
      %p89 = por %p87, %p88
      %p91 = scmp.ne.s32.totalorder %s76, %s90
      %p92 = scmp.eq.s32.totalorder %s24, 0
      %p93 = por %p91, %p92
      %s95 = sadd.s32 %s94, 1
      %p98 = scmp.eq.s32.totalorder %s18, 1
      %p99 = scmp.ne.s32.totalorder %s94, %s96
      %p100 = scmp.eq.s32.totalorder %s18, 0
      %p101 = por %p99, %p100
      %p102 = scmp.ne.s32.totalorder %s94, %s96
      %p103 = scmp.eq.s32.totalorder %s23, 1
      %p104 = por %p102, %p103
      %p105 = scmp.ne.s32.totalorder %s96, %s97
      %p106 = scmp.eq.s32.totalorder %s23, 0
      %p107 = por %p105, %p106
      %p108 = scmp.ne.s32.totalorder %s96, %s97
      %p109 = scmp.eq.s32.totalorder %s24, 1
      %p110 = por %p108, %p109
      %p112 = scmp.ne.s32.totalorder %s97, %s111
      %p113 = scmp.eq.s32.totalorder %s24, 0
      %p114 = por %p112, %p113
      %s115 = ssub.s32 %s18, %s25
      %p116 = scmp.eq.s32.totalorder %s115, 0
      %s118 = sadd.s32 %s117, 1
      %s119 = scalar_select %p116, %s117, %s118
      %p122 = pneg %p116
      %p123 = scmp.eq.s32.totalorder %s18, 1
      %p124 = por %p122, %p123
      %p125 = scmp.ne.s32.totalorder %s117, %s120
      %p126 = scmp.eq.s32.totalorder %s18, 0
      %p127 = por %p125, %p126
      %p128 = scmp.ne.s32.totalorder %s117, %s120
      %p129 = scmp.eq.s32.totalorder %s23, 1
      %p130 = por %p128, %p129
      %p131 = scmp.ne.s32.totalorder %s120, %s121
      %p132 = scmp.eq.s32.totalorder %s23, 0
      %p133 = por %p131, %p132
      %p134 = scmp.ne.s32.totalorder %s120, %s121
      %p135 = scmp.eq.s32.totalorder %s24, 1
      %p136 = por %p134, %p135
      %p138 = scmp.ne.s32.totalorder %s121, %s137
      %p139 = scmp.eq.s32.totalorder %s24, 0
      %p140 = por %p138, %p139
      %p141 = scmp.le.s32.totalorder 1, %s18
      %p142 = scmp.lt.s32.totalorder %s18, 3
      %p143 = pnand %p141, %p142
      %p144 = pneg %p143
      // Predicated region
      $region9: #{tpu_custom_call.1} parent=5 // pred_check
        _
      $region10: #{tpu_custom_call.1} parent=5 // pred_check_branch
        %146 = sbr.rel (%p143) target = $region12
      $region11: #{tpu_custom_call.1} parent=5 // pred_region
        %s147 = ssub.s32 %s18, 1
        // Predicated region
        $region13: #{tpu_custom_call.1} parent=11 // pred_check
          %p148 = pneg %p65
        $region14: #{tpu_custom_call.1} parent=11 // pred_check_branch
          %150 = sbr.rel (%p148) target = $region16
        $region15: #{tpu_custom_call.1} parent=11 // pred_region
          %152 = vsyncadd [#allocation6], 0
          %s153 = sshll.u32 %s1, 4
          %s154 = int_to_ptr.hbm [resolvable:$true] %s153
          %s155 = sshll.u32 [#allocation5], 4
          %s156 = int_to_ptr.vmem [resolvable:$true] %s155
          %161 = dma.hbm_to_vmem [thread:$0]  %s154, 2048, %s156, [#allocation6], 128, 128, 8
        $region16: #{tpu_custom_call.1} parent=11 // pred_fallthru
          _
        // Predicated region
        $region17: #{tpu_custom_call.1} parent=11 // pred_check
          %p162 = pneg %p86
        $region18: #{tpu_custom_call.1} parent=11 // pred_check_branch
          %164 = sbr.rel (%p162) target = $region20
        $region19: #{tpu_custom_call.1} parent=11 // pred_region
          %166 = vsyncadd [#allocation6], 0
          %s167 = sshll.u32 %s2, 4
          %s168 = int_to_ptr.hbm [resolvable:$true] %s167
          %s169 = sshll.u32 [#allocation7], 4
          %s170 = int_to_ptr.vmem [resolvable:$true] %s169
          %175 = dma.hbm_to_vmem [thread:$0]  %s168, 2048, %s170, [#allocation6], 128, 128, 8
        $region20: #{tpu_custom_call.1} parent=11 // pred_fallthru
          _
        // Predicated region
        $region21: #{tpu_custom_call.1} parent=11 // pred_check
          %p176 = pneg %p107
        $region22: #{tpu_custom_call.1} parent=11 // pred_check_branch
          %178 = sbr.rel (%p176) target = $region24
        $region23: #{tpu_custom_call.1} parent=11 // pred_region
          %180 = vsyncadd [#allocation9], 0
          %s182 = sshll.u32 %s3, 4
          %s183 = int_to_ptr.hbm [resolvable:$true] %s182
          %s184 = sshll.u32 [#allocation8], 4
          %s185 = int_to_ptr.vmem [resolvable:$true] %s184
          %187 = dma.hbm_to_vmem [thread:$0]  %s183, 128, %s185, [#allocation9]
        $region24: #{tpu_custom_call.1} parent=11 // pred_fallthru
          _
      $region12: #{tpu_custom_call.1} parent=5 // pred_fallthru
        _
      %p188 = scmp.lt.s32.totalorder %s18, 2
      // Predicated region
      $region25: #{tpu_custom_call.1} parent=5 // pred_check
        %p189 = pneg %p188
      $region26: #{tpu_custom_call.1} parent=5 // pred_check_branch
        %191 = sbr.rel (%p189) target = $region28
      $region27: #{tpu_custom_call.1} parent=5 // pred_region
        // Predicated region
        $region29: #{tpu_custom_call.1} parent=27 // pred_check
          %p192 = pneg %p38
        $region30: #{tpu_custom_call.1} parent=27 // pred_check_branch
          %194 = sbr.rel (%p192) target = $region32
        $region31: #{tpu_custom_call.1} parent=27 // pred_region
          %s195 = sand.u32 %s28, 1
          %s196 = scalar_lea.sflag [#allocation3], %s195
          %s197 = sand.u32 %s28, 1
          %s198 = smul.addr %s197, 16
          %s199 = scalar_lea.vmem [#allocation2], %s198
          %s200 = smul.u32 2, %s18
          %202 = vsyncadd %s196, 0
          %s203 = smul.addr %s200, 8
          %s204 = scalar_lea.hbm %s0, %s203
          %s205 = sshll.u32 %s204, 4
          %s206 = int_to_ptr.hbm [resolvable:$true] %s205
          %s207 = sshll.u32 %s199, 4
          %s208 = int_to_ptr.vmem [resolvable:$true] %s207
          %213 = dma.hbm_to_vmem [thread:$0]  %s206, 256, %s208, %s196, 128, 128, 8
        $region32: #{tpu_custom_call.1} parent=27 // pred_fallthru
          _
      $region28: #{tpu_custom_call.1} parent=5 // pred_fallthru
        _
      %p214 = scmp.le.s32.totalorder 1, %s18
      %p215 = scmp.lt.s32.totalorder %s18, 3
      %p216 = pnand %p214, %p215
      %p217 = pneg %p216
      // Predicated region
      $region33: #{tpu_custom_call.1} parent=5 // pred_check
        _
      $region34: #{tpu_custom_call.1} parent=5 // pred_check_branch
        %219 = sbr.rel (%p216) target = $region36
      $region35: #{tpu_custom_call.1} parent=5 // pred_region
        %s220 = ssub.s32 %s18, 1
        %s221 = sand.u32 %s31, 1
        %s222 = scalar_lea.sflag [#allocation3], %s221
        %s223 = sand.u32 %s31, 1
        %s224 = smul.addr %s223, 16
        %s225 = scalar_lea.vmem [#allocation2], %s224
        // Predicated region
        $region37: #{tpu_custom_call.1} parent=35 // pred_check
          %p226 = pneg %p44
        $region38: #{tpu_custom_call.1} parent=35 // pred_check_branch
          %228 = sbr.rel (%p226) target = $region40
        $region39: #{tpu_custom_call.1} parent=35 // pred_region
          %230 = dma.done %s222, 256
        $region40: #{tpu_custom_call.1} parent=35 // pred_fallthru
          _
        // Predicated region
        $region41: #{tpu_custom_call.1} parent=35 // pred_check
          %p231 = pneg %p65
        $region42: #{tpu_custom_call.1} parent=35 // pred_check_branch
          %233 = sbr.rel (%p231) target = $region44
        $region43: #{tpu_custom_call.1} parent=35 // pred_region
          %235 = dma.done [#allocation6], 2048
        $region44: #{tpu_custom_call.1} parent=35 // pred_fallthru
          _
        // Predicated region
        $region45: #{tpu_custom_call.1} parent=35 // pred_check
          %p236 = pneg %p86
        $region46: #{tpu_custom_call.1} parent=35 // pred_check_branch
          %238 = sbr.rel (%p236) target = $region48
        $region47: #{tpu_custom_call.1} parent=35 // pred_region
          %240 = dma.done [#allocation6], 2048
        $region48: #{tpu_custom_call.1} parent=35 // pred_fallthru
          _
        // Predicated region
        $region49: #{tpu_custom_call.1} parent=35 // pred_check
          %p241 = pneg %p107
        $region50: #{tpu_custom_call.1} parent=35 // pred_check_branch
          %243 = sbr.rel (%p241) target = $region52
        $region51: #{tpu_custom_call.1} parent=35 // pred_region
          %245 = dma.done [#allocation9], 128
        $region52: #{tpu_custom_call.1} parent=35 // pred_fallthru
          _
        %s246 = sand.u32 %s31, 1
        %s247 = scalar_lea.sflag [#allocation3], %s246
        %s248 = sand.u32 %s31, 1
        %s249 = smul.addr %s248, 16
        %s250 = scalar_lea.vmem [#allocation2], %s249
        %p251 = pneg %p44
        %p252 = pneg %p41
        %p253 = pneg %p65
        %p254 = pneg %p62
        %p255 = pneg %p86
        %p256 = pneg %p83
        %p257 = pneg %p107
        %p258 = pneg %p104
        %p259 = pneg %p133
        %p260 = pneg %p130
        %s261 = sand.u32 %s120, 1
        %s262 = scalar_lea.sflag [#allocation4], %s261
        %s263 = sand.u32 %s120, 1
        %s264 = smul.addr %s263, 16
        %s265 = scalar_lea.vmem [#allocation10], %s264
        %s266 = smul.u32 2, %s23
        %s267 = smul.u32 2, %s23
        %v268 = vld [vmem:[#allocation8] sm:$0x1]
        %v269 = vld [vmem:[#allocation8 + $0x1] sm:$0x1]
        %v270 = vld [vmem:[#allocation8 + $0x2] sm:$0x1]
        %v271 = vld [vmem:[#allocation8 + $0x3] sm:$0x1]
        %v272 = vld [vmem:[#allocation8 + $0x4] sm:$0x1]
        %v273 = vld [vmem:[#allocation8 + $0x5] sm:$0x1]
        %v274 = vld [vmem:[#allocation8 + $0x6] sm:$0x1]
        %v275 = vld [vmem:[#allocation8 + $0x7] sm:$0x1]
        %v276 = vld [vmem:[%s225] sm:$0xff]
        %v277 = vld [vmem:[%s225 + $0x8] sm:$0xff]
        %v278 = vld [vmem:[#allocation5] sm:$0xff]
        %v279 = vld [vmem:[#allocation5 + $0x8] sm:$0xff]
        %v280 = vld [vmem:[#allocation5 + $0x10] sm:$0xff]
        %v281 = vld [vmem:[#allocation5 + $0x18] sm:$0xff]
        %v282 = vld [vmem:[#allocation5 + $0x20] sm:$0xff]
        %v283 = vld [vmem:[#allocation5 + $0x28] sm:$0xff]
        %v284 = vld [vmem:[#allocation5 + $0x30] sm:$0xff]
        %v285 = vld [vmem:[#allocation5 + $0x38] sm:$0xff]
        %v286 = vld [vmem:[#allocation5 + $0x40] sm:$0xff]
        %v287 = vld [vmem:[#allocation5 + $0x48] sm:$0xff]
        %v288 = vld [vmem:[#allocation5 + $0x50] sm:$0xff]
        %v289 = vld [vmem:[#allocation5 + $0x58] sm:$0xff]
        %v290 = vld [vmem:[#allocation5 + $0x60] sm:$0xff]
        %v291 = vld [vmem:[#allocation5 + $0x68] sm:$0xff]
        %v292 = vld [vmem:[#allocation5 + $0x70] sm:$0xff]
        %v293 = vld [vmem:[#allocation5 + $0x78] sm:$0xff]
        %v294 = vperm.slane %v268, 0
        %295 = vmatpush.msra.mxu0 %v293
        %296 = vmatpush.msra.mxu0 %v292
        %297 = vmatpush.msra.mxu0 %v291
        %298 = vmatpush.msra.mxu0 %v290
        %299 = vmatpush.msra.mxu0 %v289
        %300 = vmatpush.msra.mxu0 %v288
        %301 = vmatpush.msra.mxu0 %v287
        %302 = vmatpush.msra.mxu0 %v286
        %303 = vmatpush.msra.mxu0 %v285
        %304 = vmatpush.msra.mxu0 %v284
        %305 = vmatpush.msra.mxu0 %v283
        %306 = vmatpush.msra.mxu0 %v282
        %307 = vmatpush.msra.mxu0 %v281
        %308 = vmatpush.msra.mxu0 %v280
        %309 = vmatpush.msra.mxu0 %v279
        %310 = vmatpush.msra.mxu0 %v278
        %311 = vmatmul.f32.gmra.mxu0 %v276
        %v312 = vpop.f32.mrf.mxu0
        %v313 = vadd.f32 %v294, %v312
        %314 = vmatmul.f32.gmra.mxu0 %v277
        %v315 = vpop.f32.mrf.mxu0
        %v316 = vadd.f32 %v294, %v315
        %317 = vdwg.mxu0
        %318 = vadd.xlane.f32.xlu0 %v313
        %v319 = vpop.xlane.xlu0 %318
        %320 = vadd.xlane.f32.xlu0 %v316
        %v321 = vpop.xlane.xlu0 %320
        %v322 = vrcp.pop 128.0
        %v323 = vmul.f32 128.0, %v322
        %v324 = vsub.f32 1.0, %v323
        %v325 = vmul.f32 %v322, %v324
        %v326 = vadd.f32 %v322, %v325
        %vm327 = vweird.f32 %v322
        %v328 = vsel %vm327, %v322, %v326
        %v329 = vmul.f32 %v319, %v328
        %v330 = vmul.f32 %v321, %v328
        %v331 = vmul.f32 %v313, %v313
        %v332 = vmul.f32 %v316, %v316
        %333 = vadd.xlane.f32.xlu0 %v331
        %v334 = vpop.xlane.xlu0 %333
        %335 = vadd.xlane.f32.xlu0 %v332
        %v336 = vpop.xlane.xlu0 %335
        %v337 = vmul.f32 %v334, %v328
        %v338 = vmul.f32 %v336, %v328
        %v339 = vmul.f32 %v329, %v329
        %v340 = vmul.f32 %v330, %v330
        %v341 = vsub.f32 %v337, %v339
        %v342 = vsub.f32 %v338, %v340
        %v343 = vmax.f32 %v341, 0.0
        %v344 = vmax.f32 %v342, 0.0
        %v345 = vsub.f32 %v313, %v329
        %v346 = vsub.f32 %v316, %v330
        %v347 = vadd.f32 %v343, 1e-05
        %v348 = vadd.f32 %v344, 1e-05
        %v349 = vrsqrt.pop %v347
        %v350 = vmul.f32 %v349, %v347
        %v351 = vmul.f32 %v350, %v349
        %v352 = vmul.f32 0.5, %v351
        %v353 = vsub.f32 1.5, %v352
        %v354 = vmul.f32 %v349, %v353
        %vm355 = vweird.f32 %v347
        %vm356 = vweird.f32 %v349
        %vm357 = vmor %vm355, %vm356
        %v358 = vsel %vm357, %v349, %v354
        %v359 = vrsqrt.pop %v348
        %v360 = vmul.f32 %v359, %v348
        %v361 = vmul.f32 %v360, %v359
        %v362 = vmul.f32 0.5, %v361
        %v363 = vsub.f32 1.5, %v362
        %v364 = vmul.f32 %v359, %v363
        %vm365 = vweird.f32 %v348
        %vm366 = vweird.f32 %v359
        %vm367 = vmor %vm365, %vm366
        %v368 = vsel %vm367, %v359, %v364
        %v369 = vmul.f32 %v345, %v358
        %v370 = vmul.f32 %v346, %v368
        %v371 = vperm.slane %v270, 0
        %v372 = vmul.f32 %v369, %v371
        %v373 = vmul.f32 %v370, %v371
        %v374 = vperm.slane %v271, 0
        %v375 = vadd.f32 %v372, %v374
        %v376 = vadd.f32 %v373, %v374
        %v377 = vmul.f32 %v375, 0.5
        %v378 = vmul.f32 %v376, 0.5
        %v379 = vmul.f32 %v375, 0.70710677
        %v380 = vmul.f32 %v376, 0.70710677
        %v381 = vmul.f32 %v379, %v379
        %v382 = vmin.f32 16.0, %v381
        %v383 = vmul.f32 %v382, 2.1237322e-06
        %v384 = vadd.f32 %v383, 0.00028619796
        %v385 = vmul.f32 %v382, %v384
        %v386 = vadd.f32 %v385, 0.0036580483
        %v387 = vmul.f32 %v382, %v386
        %v388 = vadd.f32 %v387, 0.05243302
        %v389 = vmul.f32 %v382, %v388
        %v390 = vadd.f32 %v389, 0.18741608
        %v391 = vmul.f32 %v382, %v390
        %v392 = vadd.f32 %v391, 1.1283791
        %v393 = vmul.f32 %v379, %v392
        %v394 = vmul.f32 %v382, 3.8918573e-05
        %v395 = vadd.f32 %v394, 0.001143296
        %v396 = vmul.f32 %v382, %v395
        %v397 = vadd.f32 %v396, 0.014752088
        %v398 = vmul.f32 %v382, %v397
        %v399 = vadd.f32 %v398, 0.112945676
        %v400 = vmul.f32 %v382, %v399
        %v401 = vadd.f32 %v400, 0.4994258
        %v402 = vmul.f32 %v382, %v401
        %v403 = vadd.f32 %v402, 1.0
        %v404 = vrcp.pop %v403
        %v405 = vmul.f32 %v403, %v404
        %v406 = vsub.f32 1.0, %v405
        %v407 = vmul.f32 %v404, %v406
        %v408 = vadd.f32 %v404, %v407
        %vm409 = vweird.f32 %v403
        %vm410 = vweird.f32 %v404
        %vm411 = vmor %vm409, %vm410
        %v412 = vsel %vm411, %v404, %v408
        %v413 = vand.u32 2147483647, %v403
        %vm414 = vcmp.eq.f32.partialorder %v413, 8.507059e+37
        %v415 = vand.u32 %v403, 2147483648
        %v416 = vor.u32 1.1754944e-38, %v415
        %v417 = vsel %vm414, %v416, %v412
        %v418 = vmul.f32 %v393, %v417
        %v419 = vmin.f32 %v418, 1.0
        %v420 = vmax.f32 %v419, -1.0
        %v421 = vmul.f32 %v380, %v380
        %v422 = vmin.f32 16.0, %v421
        %v423 = vmul.f32 %v422, 2.1237322e-06
        %v424 = vadd.f32 %v423, 0.00028619796
        %v425 = vmul.f32 %v422, %v424
        %v426 = vadd.f32 %v425, 0.0036580483
        %v427 = vmul.f32 %v422, %v426
        %v428 = vadd.f32 %v427, 0.05243302
        %v429 = vmul.f32 %v422, %v428
        %v430 = vadd.f32 %v429, 0.18741608
        %v431 = vmul.f32 %v422, %v430
        %v432 = vadd.f32 %v431, 1.1283791
        %v433 = vmul.f32 %v380, %v432
        %v434 = vmul.f32 %v422, 3.8918573e-05
        %v435 = vadd.f32 %v434, 0.001143296
        %v436 = vmul.f32 %v422, %v435
        %v437 = vadd.f32 %v436, 0.014752088
        %v438 = vmul.f32 %v422, %v437
        %v439 = vadd.f32 %v438, 0.112945676
        %v440 = vmul.f32 %v422, %v439
        %v441 = vadd.f32 %v440, 0.4994258
        %v442 = vmul.f32 %v422, %v441
        %v443 = vadd.f32 %v442, 1.0
        %v444 = vrcp.pop %v443
        %v445 = vmul.f32 %v443, %v444
        %v446 = vsub.f32 1.0, %v445
        %v447 = vmul.f32 %v444, %v446
        %v448 = vadd.f32 %v444, %v447
        %vm449 = vweird.f32 %v443
        %vm450 = vweird.f32 %v444
        %vm451 = vmor %vm449, %vm450
        %v452 = vsel %vm451, %v444, %v448
        %v453 = vand.u32 2147483647, %v443
        %vm454 = vcmp.eq.f32.partialorder %v453, 8.507059e+37
        %v455 = vand.u32 %v443, 2147483648
        %v456 = vor.u32 1.1754944e-38, %v455
        %v457 = vsel %vm454, %v456, %v452
        %v458 = vmul.f32 %v433, %v457
        %v459 = vmin.f32 %v458, 1.0
        %v460 = vmax.f32 %v459, -1.0
        %v461 = vadd.f32 %v420, 1.0
        %v462 = vadd.f32 %v460, 1.0
        %v463 = vmul.f32 %v377, %v461
        %v464 = vmul.f32 %v378, %v462
        %v465 = vld [vmem:[#allocation7] sm:$0xff]
        %v466 = vld [vmem:[#allocation7 + $0x8] sm:$0xff]
        %v467 = vld [vmem:[#allocation7 + $0x10] sm:$0xff]
        %v468 = vld [vmem:[#allocation7 + $0x18] sm:$0xff]
        %v469 = vld [vmem:[#allocation7 + $0x20] sm:$0xff]
        %v470 = vld [vmem:[#allocation7 + $0x28] sm:$0xff]
        %v471 = vld [vmem:[#allocation7 + $0x30] sm:$0xff]
        %v472 = vld [vmem:[#allocation7 + $0x38] sm:$0xff]
        %v473 = vld [vmem:[#allocation7 + $0x40] sm:$0xff]
        %v474 = vld [vmem:[#allocation7 + $0x48] sm:$0xff]
        %v475 = vld [vmem:[#allocation7 + $0x50] sm:$0xff]
        %v476 = vld [vmem:[#allocation7 + $0x58] sm:$0xff]
        %v477 = vld [vmem:[#allocation7 + $0x60] sm:$0xff]
        %v478 = vld [vmem:[#allocation7 + $0x68] sm:$0xff]
        %v479 = vld [vmem:[#allocation7 + $0x70] sm:$0xff]
        %v480 = vld [vmem:[#allocation7 + $0x78] sm:$0xff]
        %v481 = vperm.slane %v269, 0
        %482 = vmatpush.msra.mxu0 %v480
        %483 = vmatpush.msra.mxu0 %v479
        %484 = vmatpush.msra.mxu0 %v478
        %485 = vmatpush.msra.mxu0 %v477
        %486 = vmatpush.msra.mxu0 %v476
        %487 = vmatpush.msra.mxu0 %v475
        %488 = vmatpush.msra.mxu0 %v474
        %489 = vmatpush.msra.mxu0 %v473
        %490 = vmatpush.msra.mxu0 %v472
        %491 = vmatpush.msra.mxu0 %v471
        %492 = vmatpush.msra.mxu0 %v470
        %493 = vmatpush.msra.mxu0 %v469
        %494 = vmatpush.msra.mxu0 %v468
        %495 = vmatpush.msra.mxu0 %v467
        %496 = vmatpush.msra.mxu0 %v466
        %497 = vmatpush.msra.mxu0 %v465
        %498 = vmatmul.f32.gmra.mxu0 %v463
        %v499 = vpop.f32.mrf.mxu0
        %v500 = vadd.f32 %v481, %v499
        %501 = vmatmul.f32.gmra.mxu0 %v464
        %v502 = vpop.f32.mrf.mxu0
        %v503 = vadd.f32 %v481, %v502
        %504 = vdwg.mxu0
        %505 = vadd.xlane.f32.xlu0 %v500
        %v506 = vpop.xlane.xlu0 %505
        %507 = vadd.xlane.f32.xlu0 %v503
        %v508 = vpop.xlane.xlu0 %507
        %v509 = vmul.f32 %v506, %v328
        %v510 = vmul.f32 %v508, %v328
        %v511 = vmul.f32 %v500, %v500
        %v512 = vmul.f32 %v503, %v503
        %513 = vadd.xlane.f32.xlu0 %v511
        %v514 = vpop.xlane.xlu0 %513
        %515 = vadd.xlane.f32.xlu0 %v512
        %v516 = vpop.xlane.xlu0 %515
        %v517 = vmul.f32 %v514, %v328
        %v518 = vmul.f32 %v516, %v328
        %v519 = vmul.f32 %v509, %v509
        %v520 = vmul.f32 %v510, %v510
        %v521 = vsub.f32 %v517, %v519
        %v522 = vsub.f32 %v518, %v520
        %v523 = vmax.f32 %v521, 0.0
        %v524 = vmax.f32 %v522, 0.0
        %v525 = vsub.f32 %v500, %v509
        %v526 = vsub.f32 %v503, %v510
        %v527 = vadd.f32 %v523, 1e-05
        %v528 = vadd.f32 %v524, 1e-05
        %v529 = vrsqrt.pop %v527
        %v530 = vmul.f32 %v529, %v527
        %v531 = vmul.f32 %v530, %v529
        %v532 = vmul.f32 0.5, %v531
        %v533 = vsub.f32 1.5, %v532
        %v534 = vmul.f32 %v529, %v533
        %vm535 = vweird.f32 %v527
        %vm536 = vweird.f32 %v529
        %vm537 = vmor %vm535, %vm536
        %v538 = vsel %vm537, %v529, %v534
        %v539 = vrsqrt.pop %v528
        %v540 = vmul.f32 %v539, %v528
        %v541 = vmul.f32 %v540, %v539
        %v542 = vmul.f32 0.5, %v541
        %v543 = vsub.f32 1.5, %v542
        %v544 = vmul.f32 %v539, %v543
        %vm545 = vweird.f32 %v528
        %vm546 = vweird.f32 %v539
        %vm547 = vmor %vm545, %vm546
        %v548 = vsel %vm547, %v539, %v544
        %v549 = vmul.f32 %v525, %v538
        %v550 = vmul.f32 %v526, %v548
        %v551 = vperm.slane %v272, 0
        %v552 = vmul.f32 %v549, %v551
        %v553 = vmul.f32 %v550, %v551
        %v554 = vperm.slane %v273, 0
        %v555 = vadd.f32 %v552, %v554
        %v556 = vadd.f32 %v553, %v554
        %v557 = vadd.f32 %v555, %v276
        %v558 = vadd.f32 %v556, %v277
        %559 = vadd.xlane.f32.xlu0 %v557
        %v560 = vpop.xlane.xlu0 %559
        %561 = vadd.xlane.f32.xlu0 %v558
        %v562 = vpop.xlane.xlu0 %561
        %v563 = vmul.f32 %v560, %v328
        %v564 = vmul.f32 %v562, %v328
        %v565 = vmul.f32 %v557, %v557
        %v566 = vmul.f32 %v558, %v558
        %567 = vadd.xlane.f32.xlu0 %v565
        %v568 = vpop.xlane.xlu0 %567
        %569 = vadd.xlane.f32.xlu0 %v566
        %v570 = vpop.xlane.xlu0 %569
        %v571 = vmul.f32 %v568, %v328
        %v572 = vmul.f32 %v570, %v328
        %v573 = vmul.f32 %v563, %v563
        %v574 = vmul.f32 %v564, %v564
        %v575 = vsub.f32 %v571, %v573
        %v576 = vsub.f32 %v572, %v574
        %v577 = vmax.f32 %v575, 0.0
        %v578 = vmax.f32 %v576, 0.0
        %v579 = vsub.f32 %v557, %v563
        %v580 = vsub.f32 %v558, %v564
        %v581 = vadd.f32 %v577, 1e-05
        %v582 = vadd.f32 %v578, 1e-05
        %v583 = vrsqrt.pop %v581
        %v584 = vmul.f32 %v583, %v581
        %v585 = vmul.f32 %v584, %v583
        %v586 = vmul.f32 0.5, %v585
        %v587 = vsub.f32 1.5, %v586
        %v588 = vmul.f32 %v583, %v587
        %vm589 = vweird.f32 %v581
        %vm590 = vweird.f32 %v583
        %vm591 = vmor %vm589, %vm590
        %v592 = vsel %vm591, %v583, %v588
        %v593 = vrsqrt.pop %v582
        %v594 = vmul.f32 %v593, %v582
        %v595 = vmul.f32 %v594, %v593
        %v596 = vmul.f32 0.5, %v595
        %v597 = vsub.f32 1.5, %v596
        %v598 = vmul.f32 %v593, %v597
        %vm599 = vweird.f32 %v582
        %vm600 = vweird.f32 %v593
        %vm601 = vmor %vm599, %vm600
        %v602 = vsel %vm601, %v593, %v598
        %v603 = vmul.f32 %v579, %v592
        %v604 = vmul.f32 %v580, %v602
        %v605 = vperm.slane %v274, 0
        %v606 = vmul.f32 %v603, %v605
        %v607 = vmul.f32 %v604, %v605
        %v608 = vperm.slane %v275, 0
        %v609 = vadd.f32 %v606, %v608
        %v610 = vadd.f32 %v607, %v608
        %v611 = vmul.f32 %v609, 0.5
        %v612 = vmul.f32 %v610, 0.5
        %v613 = vmul.f32 %v609, 0.70710677
        %v614 = vmul.f32 %v610, 0.70710677
        %v615 = vmul.f32 %v613, %v613
        %v616 = vmin.f32 16.0, %v615
        %v617 = vmul.f32 %v616, 2.1237322e-06
        %v618 = vadd.f32 %v617, 0.00028619796
        %v619 = vmul.f32 %v616, %v618
        %v620 = vadd.f32 %v619, 0.0036580483
        %v621 = vmul.f32 %v616, %v620
        %v622 = vadd.f32 %v621, 0.05243302
        %v623 = vmul.f32 %v616, %v622
        %v624 = vadd.f32 %v623, 0.18741608
        %v625 = vmul.f32 %v616, %v624
        %v626 = vadd.f32 %v625, 1.1283791
        %v627 = vmul.f32 %v613, %v626
        %v628 = vmul.f32 %v616, 3.8918573e-05
        %v629 = vadd.f32 %v628, 0.001143296
        %v630 = vmul.f32 %v616, %v629
        %v631 = vadd.f32 %v630, 0.014752088
        %v632 = vmul.f32 %v616, %v631
        %v633 = vadd.f32 %v632, 0.112945676
        %v634 = vmul.f32 %v616, %v633
        %v635 = vadd.f32 %v634, 0.4994258
        %v636 = vmul.f32 %v616, %v635
        %v637 = vadd.f32 %v636, 1.0
        %v638 = vrcp.pop %v637
        %v639 = vmul.f32 %v637, %v638
        %v640 = vsub.f32 1.0, %v639
        %v641 = vmul.f32 %v638, %v640
        %v642 = vadd.f32 %v638, %v641
        %vm643 = vweird.f32 %v637
        %vm644 = vweird.f32 %v638
        %vm645 = vmor %vm643, %vm644
        %v646 = vsel %vm645, %v638, %v642
        %v647 = vand.u32 2147483647, %v637
        %vm648 = vcmp.eq.f32.partialorder %v647, 8.507059e+37
        %v649 = vand.u32 %v637, 2147483648
        %v650 = vor.u32 1.1754944e-38, %v649
        %v651 = vsel %vm648, %v650, %v646
        %v652 = vmul.f32 %v627, %v651
        %v653 = vmin.f32 %v652, 1.0
        %v654 = vmax.f32 %v653, -1.0
        %v655 = vmul.f32 %v614, %v614
        %v656 = vmin.f32 16.0, %v655
        %v657 = vmul.f32 %v656, 2.1237322e-06
        %v658 = vadd.f32 %v657, 0.00028619796
        %v659 = vmul.f32 %v656, %v658
        %v660 = vadd.f32 %v659, 0.0036580483
        %v661 = vmul.f32 %v656, %v660
        %v662 = vadd.f32 %v661, 0.05243302
        %v663 = vmul.f32 %v656, %v662
        %v664 = vadd.f32 %v663, 0.18741608
        %v665 = vmul.f32 %v656, %v664
        %v666 = vadd.f32 %v665, 1.1283791
        %v667 = vmul.f32 %v614, %v666
        %v668 = vmul.f32 %v656, 3.8918573e-05
        %v669 = vadd.f32 %v668, 0.001143296
        %v670 = vmul.f32 %v656, %v669
        %v671 = vadd.f32 %v670, 0.014752088
        %v672 = vmul.f32 %v656, %v671
        %v673 = vadd.f32 %v672, 0.112945676
        %v674 = vmul.f32 %v656, %v673
        %v675 = vadd.f32 %v674, 0.4994258
        %v676 = vmul.f32 %v656, %v675
        %v677 = vadd.f32 %v676, 1.0
        %v678 = vrcp.pop %v677
        %v679 = vmul.f32 %v677, %v678
        %v680 = vsub.f32 1.0, %v679
        %v681 = vmul.f32 %v678, %v680
        %v682 = vadd.f32 %v678, %v681
        %vm683 = vweird.f32 %v677
        %vm684 = vweird.f32 %v678
        %vm685 = vmor %vm683, %vm684
        %v686 = vsel %vm685, %v678, %v682
        %v687 = vand.u32 2147483647, %v677
        %vm688 = vcmp.eq.f32.partialorder %v687, 8.507059e+37
        %v689 = vand.u32 %v677, 2147483648
        %v690 = vor.u32 1.1754944e-38, %v689
        %v691 = vsel %vm688, %v690, %v686
        %v692 = vmul.f32 %v667, %v691
        %v693 = vmin.f32 %v692, 1.0
        %v694 = vmax.f32 %v693, -1.0
        %v695 = vadd.f32 %v654, 1.0
        %v696 = vadd.f32 %v694, 1.0
        %v697 = vmul.f32 %v611, %v695
        %v698 = vmul.f32 %v612, %v696
        %699 = vst [vmem:[%s265] sm:$0xff] %v697
        %700 = vst [vmem:[%s265 + $0x8] sm:$0xff] %v698
        %s701 = sand.u32 %s120, 1
        %s702 = scalar_lea.sflag [#allocation4], %s701
        %s703 = sand.u32 %s120, 1
        %s704 = smul.addr %s703, 16
        %s705 = scalar_lea.vmem [#allocation10], %s704
        // Predicated region
        $region53: #{tpu_custom_call.1} parent=35 // pred_check
          %p706 = pneg %p130
        $region54: #{tpu_custom_call.1} parent=35 // pred_check_branch
          %708 = sbr.rel (%p706) target = $region56
        $region55: #{tpu_custom_call.1} parent=35 // pred_region
          %s709 = smul.u32 2, %s23
          %711 = vsyncadd %s702, 0
          %s712 = smul.addr %s709, 8
          %s713 = scalar_lea.hbm %s4, %s712
          %s714 = sshll.u32 %s705, 4
          %s715 = int_to_ptr.vmem [resolvable:$true] %s714
          %s716 = sshll.u32 %s713, 4
          %s717 = int_to_ptr.hbm [resolvable:$true] %s716
          %722 = dma.vmem_to_hbm [thread:$0]  %s715, 256, %s717, %s702, 128, 128, 8
        $region56: #{tpu_custom_call.1} parent=35 // pred_fallthru
          _
      $region36: #{tpu_custom_call.1} parent=5 // pred_fallthru
        _
      %p723 = scmp.le.s32.totalorder 2, %s18
      // Predicated region
      $region57: #{tpu_custom_call.1} parent=5 // pred_check
        %p724 = pneg %p723
      $region58: #{tpu_custom_call.1} parent=5 // pred_check_branch
        %726 = sbr.rel (%p724) target = $region60
      $region59: #{tpu_custom_call.1} parent=5 // pred_region
        %s727 = ssub.s32 %s18, 2
        // Predicated region
        $region61: #{tpu_custom_call.1} parent=59 // pred_check
          %p728 = pneg %p136
        $region62: #{tpu_custom_call.1} parent=59 // pred_check_branch
          %730 = sbr.rel (%p728) target = $region64
        $region63: #{tpu_custom_call.1} parent=59 // pred_region
          %s731 = sand.u32 %s121, 1
          %s732 = scalar_lea.sflag [#allocation4], %s731
          %s733 = sand.u32 %s121, 1
          %s734 = smul.addr %s733, 16
          %s735 = scalar_lea.vmem [#allocation10], %s734
          %737 = dma.done %s732, 256
        $region64: #{tpu_custom_call.1} parent=59 // pred_fallthru
          _
      $region60: #{tpu_custom_call.1} parent=5 // pred_fallthru
        _
    $region6: #{tpu_custom_call.1} parent=1 // loop_footer
      %s22 = sadd.s32 1, %s18
    $region7: #{tpu_custom_call.1} parent=1 // loop_footer_branch
      %17 = sbr.rel target = $region3
    $region8: #{tpu_custom_call.1} parent=1 // loop_exit
      _
    %738 = vsyncpa [#allocation3], 1
    %s739 = scalar_lea.sflag [#allocation3], 1
    %740 = vsyncpa %s739, 1
    %741 = vsyncpa [#allocation6], 1
    %742 = vsyncpa [#allocation9], 1
    %743 = vsyncpa [#allocation4], 1
    %s744 = scalar_lea.sflag [#allocation4], 1
    %745 = vsyncpa %s744, 1

</llo_original>
